<compile_context>
chip_gen: v5e
topology: v5e:2x2
jax: 0.10.0
libtpu: 0.0.40
codegen_flags: <defaults>
</compile_context>

<pallas_src>
import functools

import jax
import jax.numpy as jnp
from jax.experimental import pallas as pl
from jax.experimental.pallas import tpu as pltpu


# ----------------------------- helpers ------------------------------------ #

def _round_up(x, m):
    return ((x + m - 1) // m) * m


def _pad_to(x, shape):
    pads = [(0, t - s) for s, t in zip(x.shape, shape)]
    return jnp.pad(x, pads)


def _pick_row_tile(n_pad):
    """Largest row tile in {512, 256, 128} dividing n_pad (n_pad % 128 == 0)."""
    for tr in (512, 256, 128):
        if n_pad % tr == 0:
            return tr
    return n_pad


def _vmem_limit_bytes():
    """Per-generation VMEM budget: headroom on v7x (64 MiB physical per TC),
    use more of the 128 MiB on v5e/v6e; None -> compiler default."""
    try:
        cap = pltpu.get_tpu_info().vmem_capacity_bytes
        if cap <= 64 * 1024 * 1024:
            return 48 * 1024 * 1024
        return 100 * 1024 * 1024
    except Exception:
        return None


# ----------------------------- Pallas kernels ------------------------------ #

def _fused_branch_kernel(h_real,
                         x_ref, adj_ref, wl_ref, p_ref, pool_ref,
                         out_ref, x_scr, xw_scr):
    """grid = (graph g [parallel], layer l [arbitrary], row tile r [arbitrary]).

    x_scr : persistent (N_pad, H_pad) f32 VMEM scratch holding node features.
    xw_scr: persistent (N_pad, H_pad) bf16 VMEM scratch holding X @ W_l.
    p_ref : (8, H_pad) packed per-layer params:
            row0=bias, row1=gamma, row2=beta, row3=feature-column mask.
    adj_ref: (TR, N_pad) bf16 row slab of the normalized adjacency.
    """
    l = pl.program_id(1)
    r = pl.program_id(2)
    tr = adj_ref.shape[0]
    inv_h = 1.0 / float(h_real)

    # First visit of this graph: load the (already dim-reduced) node features.
    @pl.when((l == 0) & (r == 0))
    def _():
        x_scr[...] = x_ref[...]

    # Once per layer (first row tile): XW for the whole graph, bf16 operands,
    # f32 accumulation, stored bf16 for the aggregation matmul.
    @pl.when(r == 0)
    def _():
        xw_scr[...] = jnp.dot(
            x_scr[...].astype(jnp.bfloat16), wl_ref[...],
            preferred_element_type=jnp.float32).astype(jnp.bfloat16)

    # Row slab of the aggregation:  h = A_hat[rows] @ XW + b   (bf16 x bf16, f32 acc)
    h = jnp.dot(adj_ref[...], xw_scr[...],
                preferred_element_type=jnp.float32) + p_ref[0:1, :]

    # LayerNorm over the real feature width.  Padded columns of h are zero
    # (W/bias padded columns are zero) so the sum already covers real columns
    # only; the precomputed mask row zeroes the (h - mean) contribution of the
    # padded columns before the variance.
    mask = p_ref[3:4, :]
    mean = jnp.sum(h, axis=-1, keepdims=True) * inv_h
    diff = (h - mean) * mask
    var = jnp.sum(diff * diff, axis=-1, keepdims=True) * inv_h
    hn = diff * jax.lax.rsqrt(var + 1e-5)
    hn = hn * p_ref[1:2, :] + p_ref[2:3, :]          # affine (padded cols -> 0)

    # relu + residual, written back into the row slab of the persistent scratch.
    row0 = pl.multiple_of(r * tr, tr)
    x_rows = x_scr[pl.ds(row0, tr), :]
    x_scr[pl.ds(row0, tr), :] = x_rows + jnp.maximum(hn, 0.0)

    # Last layer, last row tile: global mean pool.  Padded node rows of x_scr
    # become nonzero (bias broadcast) after layer 0 — harmless because the pool
    # matrix's padded columns are zero; keep that invariant.
    @pl.when((l == pl.num_programs(1) - 1) & (r == pl.num_programs(2) - 1))
    def _():
        out_ref[...] = jnp.dot(pool_ref[...], x_scr[...],
                               preferred_element_type=jnp.float32)


def _classifier_kernel(xcat_ref, w_ref, b_ref, out_ref):
    # logits = concat_g(pooled_g) @ W + b  as one lane-dense matmul.
    out_ref[...] = jnp.dot(xcat_ref[...], w_ref[...],
                           preferred_element_type=jnp.float32) + b_ref[0:1, :]


# ----------------------------- kernel wrappers ----------------------------- #

def fused_multi_graph_features(x_p, adj_p, w_l, p_l, pool_p, h_real):
    """x_p:(G,Np,Hp) f32, adj_p:(G,Np,Np) bf16, w_l:(G,L,Hp,Hp) bf16,
       p_l:(G,L,8,Hp) f32, pool_p:(G,Bp,Np) f32 -> pooled (G,Bp,Hp) f32."""
    G, N_pad, H_pad = x_p.shape
    L = w_l.shape[1]
    B_pad = pool_p.shape[1]
    TR = _pick_row_tile(N_pad)
    R = N_pad // TR

    kernel = functools.partial(_fused_branch_kernel, h_real)
    return pl.pallas_call(
        kernel,
        out_shape=jax.ShapeDtypeStruct((G, B_pad, H_pad), jnp.float32),
        grid_spec=pltpu.PrefetchScalarGridSpec(
            num_scalar_prefetch=0,
            grid=(G, L, R),
            in_specs=[
                # node features: fetched once per graph, resident across l, r
                pl.BlockSpec((None, N_pad, H_pad), lambda g, l, r: (g, 0, 0)),
                # adjacency row slab: streamed over r (single resident block
                # when the whole graph fits one row tile)
                pl.BlockSpec((None, TR, N_pad), lambda g, l, r: (g, r, 0)),
                # per-layer GCN weight (bf16) — only block re-fetched per layer
                pl.BlockSpec((None, None, H_pad, H_pad),
                             lambda g, l, r: (g, l, 0, 0)),
                # packed per-layer bias/gamma/beta/mask
                pl.BlockSpec((None, None, 8, H_pad),
                             lambda g, l, r: (g, l, 0, 0)),
                # mean-pool matrix: resident per graph
                pl.BlockSpec((None, B_pad, N_pad), lambda g, l, r: (g, 0, 0)),
            ],
            out_specs=pl.BlockSpec((None, B_pad, H_pad), lambda g, l, r: (g, 0, 0)),
            scratch_shapes=[pltpu.VMEM((N_pad, H_pad), jnp.float32),
                            pltpu.VMEM((N_pad, H_pad), jnp.bfloat16)],
        ),
        compiler_params=pltpu.CompilerParams(
            dimension_semantics=("parallel", "arbitrary", "arbitrary"),
            vmem_limit_bytes=_vmem_limit_bytes(),
        ),
    )(x_p, adj_p, w_l, p_l, pool_p)


def pallas_classifier(pooled, w_cls_flat, b_cls_p):
    """pooled:(G,Bp,Hp) -> logits (Bp,Cp) via one concatenated matmul."""
    G, B_pad, H_pad = pooled.shape
    C_pad = w_cls_flat.shape[-1]
    # lane-dense concat: column g*H_pad + f of xcat == pooled[g, :, f]
    xcat = jnp.transpose(pooled, (1, 0, 2)).reshape(B_pad, G * H_pad)
    return pl.pallas_call(
        _classifier_kernel,
        out_shape=jax.ShapeDtypeStruct((B_pad, C_pad), jnp.float32),
        in_specs=[pl.BlockSpec(memory_space=pltpu.MemorySpace.VMEM)] * 3,
        out_specs=pl.BlockSpec(memory_space=pltpu.MemorySpace.VMEM),
    )(xcat, w_cls_flat, b_cls_p)


# ----------------------------- graph glue (plain JAX) ---------------------- #

def build_norm_adj(edge_index, num_nodes):
    """Dense D^{-1/2} (A + remaining self loops) D^{-1/2}, matching PyG GCNConv.

    Explicit self-loop edges are dropped and replaced by a single unit self loop
    (add_remaining_self_loops semantics); duplicate off-diagonal edges accumulate."""
    src, dst = edge_index[0], edge_index[1]
    w = jnp.where(src != dst, 1.0, 0.0).astype(jnp.float32)
    a = jnp.zeros((num_nodes, num_nodes), jnp.float32).at[dst, src].add(w)
    a = a + jnp.eye(num_nodes, dtype=jnp.float32)
    deg = a.sum(axis=1)
    d_inv_sqrt = jnp.where(deg > 0.0, jax.lax.rsqrt(deg), 0.0)
    return d_inv_sqrt[:, None] * a * d_inv_sqrt[None, :]


def build_pool_matrix(batch, num_graphs_in_batch, B_pad, N_pad):
    """Row b = indicator(batch==b)/count_b  ->  pooled = P @ x is the mean pool."""
    onehot = (batch[None, :] == jnp.arange(num_graphs_in_batch)[:, None])
    onehot = onehot.astype(jnp.float32)
    counts = jnp.maximum(onehot.sum(axis=1, keepdims=True), 1.0)
    return _pad_to(onehot / counts, (B_pad, N_pad))


# ----------------------------- model --------------------------------------- #

def init_params(key, num_layers, input_dim, h_dim, num_classes, dim_reduction,
                num_graphs):
    params = {}
    keys = jax.random.split(key, 8)

    def lin(k, fan_in, fan_out):
        kw, kb = jax.random.split(k)
        scale = 1.0 / jnp.sqrt(jnp.float32(fan_in))
        w = jax.random.uniform(kw, (fan_in, fan_out), jnp.float32, -scale, scale)
        b = jax.random.uniform(kb, (fan_out,), jnp.float32, -scale, scale)
        return w, b

    if dim_reduction:
        rk = jax.random.split(keys[0], num_graphs)
        params["reduce"] = [lin(rk[g], input_dim, h_dim) for g in range(num_graphs)]
        feat = h_dim
    else:
        feat = input_dim

    layer_keys = jax.random.split(keys[3], num_layers * num_graphs)
    params["layers"] = []
    for l in range(num_layers):
        per_graph = []
        for g in range(num_graphs):
            w, bias = lin(layer_keys[l * num_graphs + g], feat, feat)
            gamma = jnp.ones((feat,), jnp.float32)
            beta = jnp.zeros((feat,), jnp.float32)
            per_graph.append((w, bias, gamma, beta))
        params["layers"].append(per_graph)

    params["classifier"] = lin(keys[4], feat * num_graphs, num_classes)
    return params


def multi_graph_classification_forward(params, xs, edge_indices, batches,
                                        dim_reduction, num_graphs_in_batch):
    num_graphs = len(xs)
    num_layers = len(params["layers"])
    assert num_layers >= 1
    N = xs[0].shape[0]
    feat = params["layers"][0][0][0].shape[0]
    num_classes = params["classifier"][1].shape[0]

    # lane/sublane-dense padded sizes
    N_pad = _round_up(N, 128)
    H_pad = _round_up(feat, 128)
    C_pad = _round_up(num_classes, 128)
    B_pad = _round_up(num_graphs_in_batch, 8)

    # Dimension reduction (tiny N x D x H matmul) in plain XLA (per perf review):
    # the kernel only ever sees (N_pad, H_pad) node features.
    if dim_reduction:
        xs_r = [xs[g].astype(jnp.float32) @ params["reduce"][g][0]
                + params["reduce"][g][1] for g in range(num_graphs)]
    else:
        xs_r = [x.astype(jnp.float32) for x in xs]

    x_p = jnp.stack([_pad_to(x, (N_pad, H_pad)) for x in xs_r])
    # adjacency in bf16 — dominant HBM/VMEM traffic
    adj = jnp.stack([_pad_to(build_norm_adj(ei, N), (N_pad, N_pad))
                     for ei in edge_indices]).astype(jnp.bfloat16)
    pool = jnp.stack([build_pool_matrix(b, num_graphs_in_batch, B_pad, N_pad)
                      for b in batches])

    # per-layer GCN weights, bf16 (only block re-fetched every layer step)
    w_l = jnp.stack([
        jnp.stack([_pad_to(params["layers"][l][g][0], (H_pad, H_pad))
                   for l in range(num_layers)])
        for g in range(num_graphs)]).astype(jnp.bfloat16)

    # packed per-layer params: row0=bias, row1=gamma, row2=beta, row3=col mask
    mask_row = (jnp.arange(H_pad) < feat).astype(jnp.float32)[None, :]

    def pack(l, g):
        rows = _pad_to(jnp.stack([params["layers"][l][g][1],    # bias
                                  params["layers"][l][g][2],    # gamma
                                  params["layers"][l][g][3]]),  # beta
                       (3, H_pad))
        return jnp.concatenate([rows, mask_row,
                                jnp.zeros((4, H_pad), jnp.float32)], axis=0)

    p_l = jnp.stack([jnp.stack([pack(l, g) for l in range(num_layers)])
                     for g in range(num_graphs)])

    pooled = fused_multi_graph_features(x_p, adj, w_l, p_l, pool, feat)

    # classifier: flattened weight layout matches the (b, g*H_pad + f) concat
    w_cls, b_cls = params["classifier"]
    w_cls_flat = jnp.concatenate(
        [_pad_to(w_cls[g * feat:(g + 1) * feat, :], (H_pad, C_pad))
         for g in range(num_graphs)], axis=0)
    b_cls_p = _pad_to(b_cls[None, :], (8, C_pad))

    logits_p = pallas_classifier(pooled, w_cls_flat, b_cls_p)
    return logits_p[:num_graphs_in_batch, :num_classes]


# ----------------------------- pure-JAX reference -------------------------- #

def reference_forward(params, xs, edge_indices, batches, dim_reduction,
                      num_graphs_in_batch):
    feats = []
    for g in range(len(xs)):
        x = xs[g].astype(jnp.float32)
        if dim_reduction:
            w, b = params["reduce"][g]
            x = x @ w + b
        a_hat = build_norm_adj(edge_indices[g], x.shape[0])
        for l in range(len(params["layers"])):
            w, bias, gamma, beta = params["layers"][l][g]
            h = a_hat @ (x @ w) + bias
            mean = h.mean(-1, keepdims=True)
            var = ((h - mean) ** 2).mean(-1, keepdims=True)
            hn = (h - mean) / jnp.sqrt(var + 1e-5) * gamma + beta
            x = x + jnp.maximum(hn, 0.0)
        onehot = (batches[g][None, :] ==
                  jnp.arange(num_graphs_in_batch)[:, None]).astype(jnp.float32)
        pooled = (onehot @ x) / jnp.maximum(onehot.sum(1, keepdims=True), 1.0)
        feats.append(pooled)
    xcat = jnp.concatenate(feats, axis=-1)
    w, b = params["classifier"]
    return xcat @ w + b


# ----------------------------- main ----------------------------------------- #

if __name__ == "__main__":
    key = jax.random.PRNGKey(0)

    num_nodes = 16
    num_edges = 32
    input_dim = 32
    h_dim = 32
    num_classes = 8
    num_layers = 2
    num_graphs = 3
    dim_reduction = True
    num_graphs_in_batch = 1          # all nodes belong to one pooled graph

    k_params, k_x, k_e = jax.random.split(key, 3)
    params = init_params(k_params, num_layers, input_dim, h_dim,
                         num_classes, dim_reduction, num_graphs)

    xk = jax.random.split(k_x, num_graphs)
    ek = jax.random.split(k_e, num_graphs)
    xs = [jax.random.normal(xk[i], (num_nodes, input_dim), jnp.float32)
          for i in range(num_graphs)]
    edge_indices = [jax.random.randint(ek[i], (2, num_edges), 0, num_nodes,
                                       dtype=jnp.int32)
                    for i in range(num_graphs)]
    batches = [jnp.zeros((num_nodes,), jnp.int32) for _ in range(num_graphs)]

    logits = multi_graph_classification_forward(
        params, xs, edge_indices, batches, dim_reduction, num_graphs_in_batch)
    jax.block_until_ready(logits)

    assert logits.shape == (num_graphs_in_batch, num_classes)
    assert bool(jnp.all(jnp.isfinite(logits)))

    # f32 pure-JAX reference; generous tolerance covers the deliberate bf16
    # operands (A_hat, W, X) in the kernel.
    ref = reference_forward(params, xs, edge_indices, batches, dim_reduction,
                            num_graphs_in_batch)
    max_err = float(jnp.max(jnp.abs(logits - ref)))
    assert max_err < 0.1, f"max abs error vs f32 reference: {max_err}"

    print("KERNEL_OK")
</pallas_src>

<mosaic_0001>
module attributes {stable_mosaic.version = 11 : i64} {
  func.func @_fused_branch_kernel(%arg0: i32, %arg1: i32, %arg2: i32, %arg3: memref<1x128x128xf32, #tpu.memory_space<vmem>>, %arg4: memref<1x128x128xbf16, #tpu.memory_space<vmem>>, %arg5: memref<1x1x128x128xbf16, #tpu.memory_space<vmem>>, %arg6: memref<1x1x8x128xf32, #tpu.memory_space<vmem>>, %arg7: memref<1x8x128xf32, #tpu.memory_space<vmem>>, %arg8: memref<1x8x128xf32, #tpu.memory_space<vmem>>, %arg9: memref<128x128xf32, #tpu.memory_space<vmem>>, %arg10: memref<128x128xbf16, #tpu.memory_space<vmem>>) attributes {dimension_semantics = [#tpu.dimension_semantics<parallel>, #tpu.dimension_semantics<arbitrary>, #tpu.dimension_semantics<arbitrary>], iteration_bounds = array<i64: 3, 2, 1>, scalar_prefetch = 0 : i64, scratch_operands = 2 : i64, tpu.core_type = #tpu.core_type<tc>, window_params = [{transform_indices = @transform_0, window_bounds = array<i64: 1, 128, 128>}, {transform_indices = @transform_1, window_bounds = array<i64: 1, 128, 128>}, {transform_indices = @transform_2, window_bounds = array<i64: 1, 1, 128, 128>}, {transform_indices = @transform_3, window_bounds = array<i64: 1, 1, 8, 128>}, {transform_indices = @transform_4, window_bounds = array<i64: 1, 8, 128>}, {transform_indices = @transform_5, window_bounds = array<i64: 1, 8, 128>}]} {
    %c0_i32 = arith.constant 0 : i32
    %0 = arith.cmpi eq, %arg1, %c0_i32 : i32
    %c0_i32_0 = arith.constant 0 : i32
    %1 = arith.cmpi eq, %arg2, %c0_i32_0 : i32
    %2 = arith.andi %0, %1 : i1
    %3 = arith.extui %2 : i1 to i32
    %c0_i32_1 = arith.constant 0 : i32
    %4 = arith.cmpi ne, %3, %c0_i32_1 : i32
    scf.if %4 {
      %c0_31 = arith.constant 0 : index
      %c0_32 = arith.constant 0 : index
      %c0_33 = arith.constant 0 : index
      %58 = vector.load %arg3[%c0_31, %c0_32, %c0_33] : memref<1x128x128xf32, #tpu.memory_space<vmem>>, vector<1x128x128xf32>
      %59 = vector.shape_cast %58 : vector<1x128x128xf32> to vector<128x128xf32>
      %c0_34 = arith.constant 0 : index
      %c0_35 = arith.constant 0 : index
      %60 = vector.load %arg9[%c0_34, %c0_35] : memref<128x128xf32, #tpu.memory_space<vmem>>, vector<128x128xf32>
      tpu.vector_store %arg9[%c0_34, %c0_35], %59 {strides = array<i32>} : memref<128x128xf32, #tpu.memory_space<vmem>>, vector<128x128xf32>,
    } else {
    }
    %c0_i32_2 = arith.constant 0 : i32
    %5 = arith.cmpi eq, %arg2, %c0_i32_2 : i32
    %6 = arith.extui %5 : i1 to i32
    %c0_i32_3 = arith.constant 0 : i32
    %7 = arith.cmpi ne, %6, %c0_i32_3 : i32
    scf.if %7 {
      %c0_31 = arith.constant 0 : index
      %c0_32 = arith.constant 0 : index
      %58 = vector.load %arg9[%c0_31, %c0_32] : memref<128x128xf32, #tpu.memory_space<vmem>>, vector<128x128xf32>
      %59 = arith.truncf %58 : vector<128x128xf32> to vector<128x128xbf16>
      %c0_33 = arith.constant 0 : index
      %c0_34 = arith.constant 0 : index
      %c0_35 = arith.constant 0 : index
      %c0_36 = arith.constant 0 : index
      %60 = vector.load %arg5[%c0_33, %c0_34, %c0_35, %c0_36] : memref<1x1x128x128xbf16, #tpu.memory_space<vmem>>, vector<1x1x128x128xbf16>
      %61 = vector.shape_cast %60 : vector<1x1x128x128xbf16> to vector<128x128xbf16>
      %cst_37 = arith.constant dense<0.000000e+00> : vector<128x128xf32>
      %62 = tpu.matmul %59, %61, %cst_37 {dimension_numbers = #tpu.dot_dimension_numbers<[1], [0], [0], [1], [0, 0, 1, 1], [], []>} : vector<128x128xbf16>, vector<128x128xbf16>, vector<128x128xf32> -> vector<128x128xf32>
      %63 = arith.truncf %62 : vector<128x128xf32> to vector<128x128xbf16>
      %c0_38 = arith.constant 0 : index
      %c0_39 = arith.constant 0 : index
      %64 = vector.load %arg10[%c0_38, %c0_39] : memref<128x128xbf16, #tpu.memory_space<vmem>>, vector<128x128xbf16>
      tpu.vector_store %arg10[%c0_38, %c0_39], %63 {strides = array<i32>} : memref<128x128xbf16, #tpu.memory_space<vmem>>, vector<128x128xbf16>,
    } else {
    }
    %c0 = arith.constant 0 : index
    %c0_4 = arith.constant 0 : index
    %c0_5 = arith.constant 0 : index
    %8 = vector.load %arg4[%c0, %c0_4, %c0_5] : memref<1x128x128xbf16, #tpu.memory_space<vmem>>, vector<1x128x128xbf16>
    %9 = vector.shape_cast %8 : vector<1x128x128xbf16> to vector<128x128xbf16>
    %c0_6 = arith.constant 0 : index
    %c0_7 = arith.constant 0 : index
    %10 = vector.load %arg10[%c0_6, %c0_7] : memref<128x128xbf16, #tpu.memory_space<vmem>>, vector<128x128xbf16>
    %cst = arith.constant dense<0.000000e+00> : vector<128x128xf32>
    %11 = tpu.matmul %9, %10, %cst {dimension_numbers = #tpu.dot_dimension_numbers<[1], [0], [0], [1], [0, 0, 1, 1], [], []>} : vector<128x128xbf16>, vector<128x128xbf16>, vector<128x128xf32> -> vector<128x128xf32>
    %c0_8 = arith.constant 0 : index
    %c0_9 = arith.constant 0 : index
    %c0_10 = arith.constant 0 : index
    %c0_11 = arith.constant 0 : index
    %12 = vector.load %arg6[%c0_8, %c0_9, %c0_10, %c0_11] : memref<1x1x8x128xf32, #tpu.memory_space<vmem>>, vector<1x1x1x128xf32>
    %13 = vector.shape_cast %12 : vector<1x1x1x128xf32> to vector<1x128xf32>
    %14 = vector.broadcast %13 : vector<1x128xf32> to vector<128x128xf32>
    %15 = arith.addf %11, %14 : vector<128x128xf32>
    %c0_12 = arith.constant 0 : index
    %c0_13 = arith.constant 0 : index
    %c3 = arith.constant 3 : index
    %c0_14 = arith.constant 0 : index
    %16 = vector.load %arg6[%c0_12, %c0_13, %c3, %c0_14] : memref<1x1x8x128xf32, #tpu.memory_space<vmem>>, vector<1x1x1x128xf32>
    %17 = vector.shape_cast %16 : vector<1x1x1x128xf32> to vector<1x128xf32>
    %cst_15 = arith.constant dense<0.000000e+00> : vector<128xf32>
    %18 = vector.multi_reduction <add>, %15, %cst_15 [1] : vector<128x128xf32> to vector<128xf32>
    %19 = vector.shape_cast %18 : vector<128xf32> to vector<128x1xf32>
    %cst_16 = arith.constant 3.125000e-02 : f32
    %20 = vector.broadcast %cst_16 : f32 to vector<128x1xf32>
    %21 = arith.mulf %19, %20 : vector<128x1xf32>
    %22 = vector.broadcast %21 : vector<128x1xf32> to vector<128x128xf32>
    %23 = arith.subf %15, %22 : vector<128x128xf32>
    %24 = vector.broadcast %17 : vector<1x128xf32> to vector<128x128xf32>
    %25 = arith.mulf %23, %24 : vector<128x128xf32>
    %26 = arith.mulf %25, %25 : vector<128x128xf32>
    %cst_17 = arith.constant dense<0.000000e+00> : vector<128xf32>
    %27 = vector.multi_reduction <add>, %26, %cst_17 [1] : vector<128x128xf32> to vector<128xf32>
    %28 = vector.shape_cast %27 : vector<128xf32> to vector<128x1xf32>
    %cst_18 = arith.constant 3.125000e-02 : f32
    %29 = vector.broadcast %cst_18 : f32 to vector<128x1xf32>
    %30 = arith.mulf %28, %29 : vector<128x1xf32>
    %cst_19 = arith.constant 9.99999974E-6 : f32
    %31 = vector.broadcast %cst_19 : f32 to vector<128x1xf32>
    %32 = arith.addf %30, %31 : vector<128x1xf32>
    %33 = math.rsqrt %32 : vector<128x1xf32>
    %34 = vector.broadcast %33 : vector<128x1xf32> to vector<128x128xf32>
    %35 = arith.mulf %25, %34 : vector<128x128xf32>
    %c0_20 = arith.constant 0 : index
    %c0_21 = arith.constant 0 : index
    %c1 = arith.constant 1 : index
    %c0_22 = arith.constant 0 : index
    %36 = vector.load %arg6[%c0_20, %c0_21, %c1, %c0_22] : memref<1x1x8x128xf32, #tpu.memory_space<vmem>>, vector<1x1x1x128xf32>
    %37 = vector.shape_cast %36 : vector<1x1x1x128xf32> to vector<1x128xf32>
    %38 = vector.broadcast %37 : vector<1x128xf32> to vector<128x128xf32>
    %39 = arith.mulf %35, %38 : vector<128x128xf32>
    %c0_23 = arith.constant 0 : index
    %c0_24 = arith.constant 0 : index
    %c2 = arith.constant 2 : index
    %c0_25 = arith.constant 0 : index
    %40 = vector.load %arg6[%c0_23, %c0_24, %c2, %c0_25] : memref<1x1x8x128xf32, #tpu.memory_space<vmem>>, vector<1x1x1x128xf32>
    %41 = vector.shape_cast %40 : vector<1x1x1x128xf32> to vector<1x128xf32>
    %42 = vector.broadcast %41 : vector<1x128xf32> to vector<128x128xf32>
    %43 = arith.addf %39, %42 : vector<128x128xf32>
    %c128_i32 = arith.constant 128 : i32
    %44 = arith.muli %arg2, %c128_i32 : i32
    %45 = tpu.assume_multiple %44, 128 : i32
    %46 = arith.index_cast %45 : i32 to index
    %c0_26 = arith.constant 0 : index
    %47 = vector.load %arg9[%46, %c0_26] : memref<128x128xf32, #tpu.memory_space<vmem>>, vector<128x128xf32>
    %cst_27 = arith.constant 0.000000e+00 : f32
    %48 = vector.broadcast %cst_27 : f32 to vector<128x128xf32>
    %49 = arith.maximumf %43, %48 : vector<128x128xf32>
    %50 = arith.addf %47, %49 : vector<128x128xf32>
    %51 = arith.index_cast %45 : i32 to index
    %c0_28 = arith.constant 0 : index
    %52 = vector.load %arg9[%51, %c0_28] : memref<128x128xf32, #tpu.memory_space<vmem>>, vector<128x128xf32>
    tpu.vector_store %arg9[%51, %c0_28], %50 {strides = array<i32>} : memref<128x128xf32, #tpu.memory_space<vmem>>, vector<128x128xf32>,
    %c1_i32 = arith.constant 1 : i32
    %53 = arith.cmpi eq, %arg1, %c1_i32 : i32
    %c0_i32_29 = arith.constant 0 : i32
    %54 = arith.cmpi eq, %arg2, %c0_i32_29 : i32
    %55 = arith.andi %53, %54 : i1
    %56 = arith.extui %55 : i1 to i32
    %c0_i32_30 = arith.constant 0 : i32
    %57 = arith.cmpi ne, %56, %c0_i32_30 : i32
    scf.if %57 {
      %c0_31 = arith.constant 0 : index
      %c0_32 = arith.constant 0 : index
      %c0_33 = arith.constant 0 : index
      %58 = vector.load %arg7[%c0_31, %c0_32, %c0_33] : memref<1x8x128xf32, #tpu.memory_space<vmem>>, vector<1x8x128xf32>
      %59 = vector.shape_cast %58 : vector<1x8x128xf32> to vector<8x128xf32>
      %c0_34 = arith.constant 0 : index
      %c0_35 = arith.constant 0 : index
      %60 = vector.load %arg9[%c0_34, %c0_35] : memref<128x128xf32, #tpu.memory_space<vmem>>, vector<128x128xf32>
      %cst_36 = arith.constant dense<0.000000e+00> : vector<8x128xf32>
      %61 = tpu.matmul %59, %60, %cst_36 {dimension_numbers = #tpu.dot_dimension_numbers<[1], [0], [0], [1], [0, 0, 1, 1], [], []>} : vector<8x128xf32>, vector<128x128xf32>, vector<8x128xf32> -> vector<8x128xf32>
      %c0_37 = arith.constant 0 : index
      %c0_38 = arith.constant 0 : index
      %c0_39 = arith.constant 0 : index
      %62 = vector.load %arg8[%c0_37, %c0_38, %c0_39] : memref<1x8x128xf32, #tpu.memory_space<vmem>>, vector<1x8x128xf32>
      %63 = vector.shape_cast %62 : vector<1x8x128xf32> to vector<8x128xf32>
      %64 = vector.shape_cast %61 : vector<8x128xf32> to vector<1x8x128xf32>
      tpu.vector_store %arg8[%c0_37, %c0_38, %c0_39], %64 {strides = array<i32>} : memref<1x8x128xf32, #tpu.memory_space<vmem>>, vector<1x8x128xf32>,
    } else {
    }
    return
  }
  func.func @transform_0(%arg0: i32, %arg1: i32, %arg2: i32) -> (i32, i32, i32) {
    %c0_i32 = arith.constant 0 : i32
    %c0_i32_0 = arith.constant 0 : i32
    %c0_i32_1 = arith.constant 0 : i32
    return %arg0, %c0_i32, %c0_i32_0 : i32, i32, i32
  }
  func.func @transform_1(%arg0: i32, %arg1: i32, %arg2: i32) -> (i32, i32, i32) {
    %c0_i32 = arith.constant 0 : i32
    %c0_i32_0 = arith.constant 0 : i32
    return %arg0, %arg2, %c0_i32 : i32, i32, i32
  }
  func.func @transform_2(%arg0: i32, %arg1: i32, %arg2: i32) -> (i32, i32, i32, i32) {
    %c0_i32 = arith.constant 0 : i32
    %c0_i32_0 = arith.constant 0 : i32
    %c0_i32_1 = arith.constant 0 : i32
    return %arg0, %arg1, %c0_i32, %c0_i32_0 : i32, i32, i32, i32
  }
  func.func @transform_3(%arg0: i32, %arg1: i32, %arg2: i32) -> (i32, i32, i32, i32) {
    %c0_i32 = arith.constant 0 : i32
    %c0_i32_0 = arith.constant 0 : i32
    %c0_i32_1 = arith.constant 0 : i32
    return %arg0, %arg1, %c0_i32, %c0_i32_0 : i32, i32, i32, i32
  }
  func.func @transform_4(%arg0: i32, %arg1: i32, %arg2: i32) -> (i32, i32, i32) {
    %c0_i32 = arith.constant 0 : i32
    %c0_i32_0 = arith.constant 0 : i32
    %c0_i32_1 = arith.constant 0 : i32
    return %arg0, %c0_i32, %c0_i32_0 : i32, i32, i32
  }
  func.func @transform_5(%arg0: i32, %arg1: i32, %arg2: i32) -> (i32, i32, i32) {
    %c0_i32 = arith.constant 0 : i32
    %c0_i32_0 = arith.constant 0 : i32
    %c0_i32_1 = arith.constant 0 : i32
    return %arg0, %c0_i32, %c0_i32_0 : i32, i32, i32
  }
}

</mosaic_0001>

<llo_original>
// kernel: tpu_custom_call.1
$region0: #{tpu_custom_call.1}
  #allocation0 [shape = 'u32[]', space=smem, size = 0x4, offset = 0x4, fixed_abs, tag = 'smem constant byte address 0x4 - core index']
  #allocation1 [shape = 'u32[72,128]{1,0:T(1,128)}', space=vmem, size = 0x9000, scoped, tag = 'internal scratch']
  #allocation2 [shape = 'f32[128,128]{1,0:T(8,128)}', space=vmem, size = 0x10000, scoped, tag = 'scratch operand']
  #allocation3 [shape = 'bf16[128,128]{1,0:T(8,128)(2,1)}', space=vmem, size = 0x8000, scoped, tag = 'scratch operand']
  %s0 = inlined_call_operand.hbm [shape: f32[3,128,128], index: 0, kind: input, shape index: {}]
  %s1 = inlined_call_operand.hbm [shape: bf16[3,128,128], index: 1, kind: input, shape index: {}]
  %s2 = inlined_call_operand.hbm [shape: bf16[3,2,128,128], index: 2, kind: input, shape index: {}]
  %s3 = inlined_call_operand.hbm [shape: f32[3,2,8,128], index: 3, kind: input, shape index: {}]
  %s4 = inlined_call_operand.hbm [shape: f32[3,8,128], index: 4, kind: input, shape index: {}]
  %s5 = inlined_call_operand.hbm [shape: f32[3,8,128], index: 5, kind: output, shape index: {}]
  %s6 = sld [smem:[#allocation0]]
  $region85: #{tpu_custom_call.1} parent=0
    _
  %s8 = ssub.s32 1, %s6
  %s9 = scalar_select 0, %s8, %s6
  $region1: #{tpu_custom_call.1} parent=0
    #allocation4 [shape = 'u8[131072]{0}', space=vmem, size = 0x20000, scoped, tag = 'input window, operand 0']
    #allocation5 [shape = 's32[2]{0}', space=sflag, size = 0x8, scoped, tag = 'scoped memory for tpu_custom_call.1']
    #allocation6 [shape = 's32[2]{0}', space=sflag, size = 0x8, scoped, tag = 'scoped memory for tpu_custom_call.1']
    #allocation7 [shape = 'u8[65536]{0}', space=vmem, size = 0x10000, scoped, tag = 'input window, operand 1']
    #allocation8 [shape = 's32[2]{0}', space=sflag, size = 0x8, scoped, tag = 'scoped memory for tpu_custom_call.1']
    #allocation9 [shape = 'u8[65536]{0}', space=vmem, size = 0x10000, scoped, tag = 'input window, operand 2']
    #allocation10 [shape = 'u8[8192]{0}', space=vmem, size = 0x2000, scoped, tag = 'input window, operand 3']
    #allocation11 [shape = 's32[2]{0}', space=sflag, size = 0x8, scoped, tag = 'scoped memory for tpu_custom_call.1']
    #allocation12 [shape = 'u8[8192]{0}', space=vmem, size = 0x2000, scoped, tag = 'input window, operand 4']
    #allocation13 [shape = 'u8[8192]{0}', space=vmem, size = 0x2000, scoped, tag = 'output window, operand 0']
    %10 = vsyncpa [#allocation5], 0
    %s11 = scalar_lea.sflag [#allocation5], 1
    %12 = vsyncpa %s11, 0
    %13 = vsyncpa [#allocation8], 0
    %s14 = scalar_lea.sflag [#allocation8], 1
    %15 = vsyncpa %s14, 0
    %16 = vsyncpa [#allocation11], 0
    %s17 = scalar_lea.sflag [#allocation11], 1
    %18 = vsyncpa %s17, 0
    %19 = vsyncpa [#allocation6], 0
    %s20 = scalar_lea.sflag [#allocation6], 1
    %21 = vsyncpa %s20, 0
    loop: start=0, step=1, limit=8
    $region2: #{tpu_custom_call.1} parent=1 // loop_pre_header
      _
    $region3: #{tpu_custom_call.1} parent=1 // loop_header
      %s23 = sphi 0, %s27
      %p24 = scmp.ge.s32.totalorder %s23, 8
      %s30 = sphi 0, %s49
      %s31 = sphi 0, %s45
      %s32 = sphi 0, %s41
      %s33 = sphi 0, %s30
      %s34 = sphi 0, %s31
      %s35 = sphi 0, %s32
      %s36 = sphi 0, %s33
      %s37 = sphi 0, %s34
      %s38 = sphi 0, %s35
      %s52 = sphi 0, %s54
      %s55 = sphi 0, %s52
      %s56 = sphi 0, %s55
      %s72 = sphi 0, %s56
      %s80 = sphi 0, %s82
      %s83 = sphi 0, %s80
      %s84 = sphi 0, %s83
      %s100 = sphi 0, %s84
      %s108 = sphi 0, %s110
      %s111 = sphi 0, %s108
      %s112 = sphi 0, %s111
      %s128 = sphi 0, %s112
      %s136 = sphi 0, %s138
      %s139 = sphi 0, %s136
      %s140 = sphi 0, %s139
      %s156 = sphi 0, %s140
      %s162 = sphi 0, %s164
      %s165 = sphi 0, %s162
      %s166 = sphi 0, %s165
      %s182 = sphi 0, %s166
      %s188 = sphi 0, %s190
      %s191 = sphi 0, %s188
      %s192 = sphi 0, %s191
      %s208 = sphi 0, %s192
    $region4: #{tpu_custom_call.1} parent=1 // loop_header_branch
      %26 = sbr.rel (%p24) target = $region8
    $region5: #{tpu_custom_call.1} parent=1 // loop_body
      %s28 = ssub.s32 %s23, 1
      %s29 = ssub.s32 %s23, 2
      %s39 = sadd.s32 1, %s32
      %p40 = scmp.ge.s32.totalorder %s39, 1
      %s41 = scalar_select %p40, 0, %s39
      %s42 = sadd.s32 1, %s31
      %s43 = scalar_select %p40, %s42, %s31
      %p44 = scmp.ge.s32.totalorder %s43, 2
      %s45 = scalar_select %p44, 0, %s43
      %s46 = sadd.s32 1, %s30
      %s47 = scalar_select %p44, %s46, %s30
      %p48 = scmp.ge.s32.totalorder %s47, 3
      %s49 = scalar_select %p48, 0, %s47
      %s50 = ssub.s32 %s30, %s49
      %p51 = scmp.eq.s32.totalorder %s50, 0
      %s53 = sadd.s32 %s52, 1
      %s54 = scalar_select %p51, %s52, %s53
      %p57 = pneg %p51
      %p58 = scmp.eq.s32.totalorder %s23, 5
      %p59 = por %p57, %p58
      %p60 = scmp.ne.s32.totalorder %s52, %s55
      %p61 = scmp.eq.s32.totalorder %s23, 0
      %p62 = por %p60, %p61
      %p63 = scmp.ne.s32.totalorder %s52, %s55
      %p64 = scmp.eq.s32.totalorder %s28, 5
      %p65 = por %p63, %p64
      %p66 = scmp.ne.s32.totalorder %s55, %s56
      %p67 = scmp.eq.s32.totalorder %s28, 0
      %p68 = por %p66, %p67
      %p69 = scmp.ne.s32.totalorder %s55, %s56
      %p70 = scmp.eq.s32.totalorder %s29, 5
      %p71 = por %p69, %p70
      %p73 = scmp.ne.s32.totalorder %s56, %s72
      %p74 = scmp.eq.s32.totalorder %s29, 0
      %p75 = por %p73, %p74
      %s76 = ssub.s32 %s30, %s49
      %s77 = ssub.s32 %s32, %s41
      %s78 = sor.u32 %s76, %s77
      %p79 = scmp.eq.s32.totalorder %s78, 0
      %s81 = sadd.s32 %s80, 1
      %s82 = scalar_select %p79, %s80, %s81
      %p85 = pneg %p79
      %p86 = scmp.eq.s32.totalorder %s23, 5
      %p87 = por %p85, %p86
      %p88 = scmp.ne.s32.totalorder %s80, %s83
      %p89 = scmp.eq.s32.totalorder %s23, 0
      %p90 = por %p88, %p89
      %p91 = scmp.ne.s32.totalorder %s80, %s83
      %p92 = scmp.eq.s32.totalorder %s28, 5
      %p93 = por %p91, %p92
      %p94 = scmp.ne.s32.totalorder %s83, %s84
      %p95 = scmp.eq.s32.totalorder %s28, 0
      %p96 = por %p94, %p95
      %p97 = scmp.ne.s32.totalorder %s83, %s84
      %p98 = scmp.eq.s32.totalorder %s29, 5
      %p99 = por %p97, %p98
      %p101 = scmp.ne.s32.totalorder %s84, %s100
      %p102 = scmp.eq.s32.totalorder %s29, 0
      %p103 = por %p101, %p102
      %s104 = ssub.s32 %s30, %s49
      %s105 = ssub.s32 %s31, %s45
      %s106 = sor.u32 %s104, %s105
      %p107 = scmp.eq.s32.totalorder %s106, 0
      %s109 = sadd.s32 %s108, 1
      %s110 = scalar_select %p107, %s108, %s109
      %p113 = pneg %p107
      %p114 = scmp.eq.s32.totalorder %s23, 5
      %p115 = por %p113, %p114
      %p116 = scmp.ne.s32.totalorder %s108, %s111
      %p117 = scmp.eq.s32.totalorder %s23, 0
      %p118 = por %p116, %p117
      %p119 = scmp.ne.s32.totalorder %s108, %s111
      %p120 = scmp.eq.s32.totalorder %s28, 5
      %p121 = por %p119, %p120
      %p122 = scmp.ne.s32.totalorder %s111, %s112
      %p123 = scmp.eq.s32.totalorder %s28, 0
      %p124 = por %p122, %p123
      %p125 = scmp.ne.s32.totalorder %s111, %s112
      %p126 = scmp.eq.s32.totalorder %s29, 5
      %p127 = por %p125, %p126
      %p129 = scmp.ne.s32.totalorder %s112, %s128
      %p130 = scmp.eq.s32.totalorder %s29, 0
      %p131 = por %p129, %p130
      %s132 = ssub.s32 %s30, %s49
      %s133 = ssub.s32 %s31, %s45
      %s134 = sor.u32 %s132, %s133
      %p135 = scmp.eq.s32.totalorder %s134, 0
      %s137 = sadd.s32 %s136, 1
      %s138 = scalar_select %p135, %s136, %s137
      %p141 = pneg %p135
      %p142 = scmp.eq.s32.totalorder %s23, 5
      %p143 = por %p141, %p142
      %p144 = scmp.ne.s32.totalorder %s136, %s139
      %p145 = scmp.eq.s32.totalorder %s23, 0
      %p146 = por %p144, %p145
      %p147 = scmp.ne.s32.totalorder %s136, %s139
      %p148 = scmp.eq.s32.totalorder %s28, 5
      %p149 = por %p147, %p148
      %p150 = scmp.ne.s32.totalorder %s139, %s140
      %p151 = scmp.eq.s32.totalorder %s28, 0
      %p152 = por %p150, %p151
      %p153 = scmp.ne.s32.totalorder %s139, %s140
      %p154 = scmp.eq.s32.totalorder %s29, 5
      %p155 = por %p153, %p154
      %p157 = scmp.ne.s32.totalorder %s140, %s156
      %p158 = scmp.eq.s32.totalorder %s29, 0
      %p159 = por %p157, %p158
      %s160 = ssub.s32 %s30, %s49
      %p161 = scmp.eq.s32.totalorder %s160, 0
      %s163 = sadd.s32 %s162, 1
      %s164 = scalar_select %p161, %s162, %s163
      %p167 = pneg %p161
      %p168 = scmp.eq.s32.totalorder %s23, 5
      %p169 = por %p167, %p168
      %p170 = scmp.ne.s32.totalorder %s162, %s165
      %p171 = scmp.eq.s32.totalorder %s23, 0
      %p172 = por %p170, %p171
      %p173 = scmp.ne.s32.totalorder %s162, %s165
      %p174 = scmp.eq.s32.totalorder %s28, 5
      %p175 = por %p173, %p174
      %p176 = scmp.ne.s32.totalorder %s165, %s166
      %p177 = scmp.eq.s32.totalorder %s28, 0
      %p178 = por %p176, %p177
      %p179 = scmp.ne.s32.totalorder %s165, %s166
      %p180 = scmp.eq.s32.totalorder %s29, 5
      %p181 = por %p179, %p180
      %p183 = scmp.ne.s32.totalorder %s166, %s182
      %p184 = scmp.eq.s32.totalorder %s29, 0
      %p185 = por %p183, %p184
      %s186 = ssub.s32 %s30, %s49
      %p187 = scmp.eq.s32.totalorder %s186, 0
      %s189 = sadd.s32 %s188, 1
      %s190 = scalar_select %p187, %s188, %s189
      %p193 = pneg %p187
      %p194 = scmp.eq.s32.totalorder %s23, 5
      %p195 = por %p193, %p194
      %p196 = scmp.ne.s32.totalorder %s188, %s191
      %p197 = scmp.eq.s32.totalorder %s23, 0
      %p198 = por %p196, %p197
      %p199 = scmp.ne.s32.totalorder %s188, %s191
      %p200 = scmp.eq.s32.totalorder %s28, 5
      %p201 = por %p199, %p200
      %p202 = scmp.ne.s32.totalorder %s191, %s192
      %p203 = scmp.eq.s32.totalorder %s28, 0
      %p204 = por %p202, %p203
      %p205 = scmp.ne.s32.totalorder %s191, %s192
      %p206 = scmp.eq.s32.totalorder %s29, 5
      %p207 = por %p205, %p206
      %p209 = scmp.ne.s32.totalorder %s192, %s208
      %p210 = scmp.eq.s32.totalorder %s29, 0
      %p211 = por %p209, %p210
      %p212 = scmp.le.s32.totalorder 1, %s23
      %p213 = scmp.lt.s32.totalorder %s23, 7
      %p214 = pnand %p212, %p213
      %p215 = pneg %p214
      // Predicated region
      $region9: #{tpu_custom_call.1} parent=5 // pred_check
        _
      $region10: #{tpu_custom_call.1} parent=5 // pred_check_branch
        %217 = sbr.rel (%p214) target = $region12
      $region11: #{tpu_custom_call.1} parent=5 // pred_region
        %s218 = ssub.s32 %s23, 1
      $region12: #{tpu_custom_call.1} parent=5 // pred_fallthru
        _
      %p219 = scmp.lt.s32.totalorder %s23, 6
      // Predicated region
      $region13: #{tpu_custom_call.1} parent=5 // pred_check
        %p220 = pneg %p219
      $region14: #{tpu_custom_call.1} parent=5 // pred_check_branch
        %222 = sbr.rel (%p220) target = $region16
      $region15: #{tpu_custom_call.1} parent=5 // pred_region
        // Predicated region
        $region17: #{tpu_custom_call.1} parent=15 // pred_check
          %p223 = pneg %p62
        $region18: #{tpu_custom_call.1} parent=15 // pred_check_branch
          %225 = sbr.rel (%p223) target = $region20
        $region19: #{tpu_custom_call.1} parent=15 // pred_region
          %s226 = sand.u32 %s52, 1
          %s227 = scalar_lea.sflag [#allocation5], %s226
          %s228 = sand.u32 %s52, 1
          %s229 = smul.addr %s228, 128
          %s230 = scalar_lea.vmem [#allocation4], %s229
          %232 = vsyncadd %s227, 0
          %s233 = smul.addr %s30, 16
          %s234 = smul.addr %s233, 8
          %s235 = scalar_lea.hbm %s0, %s234
          %s236 = sshll.u32 %s235, 4
          %s237 = int_to_ptr.hbm [resolvable:$true] %s236
          %s238 = sshll.u32 %s230, 4
          %s239 = int_to_ptr.vmem [resolvable:$true] %s238
          %244 = dma.hbm_to_vmem [thread:$0]  %s237, 2048, %s239, %s227, 128, 128, 8
        $region20: #{tpu_custom_call.1} parent=15 // pred_fallthru
          _
        // Predicated region
        $region21: #{tpu_custom_call.1} parent=15 // pred_check
          %p245 = pneg %p90
        $region22: #{tpu_custom_call.1} parent=15 // pred_check_branch
          %247 = sbr.rel (%p245) target = $region24
        $region23: #{tpu_custom_call.1} parent=15 // pred_region
          %s248 = sand.u32 %s23, 1
          %s249 = scalar_lea.sflag [#allocation8], %s248
          %s250 = sand.u32 %s80, 1
          %s251 = smul.addr %s250, 64
          %s252 = scalar_lea.vmem [#allocation7], %s251
          %s253 = smul.u32 16, %s32
          %255 = vsyncadd %s249, 0
          %s256 = smul.addr %s30, 16
          %s257 = sadd.s32 %s253, %s256
          %s258 = smul.addr %s257, 4
          %s259 = scalar_lea.hbm %s1, %s258
          %s260 = sshll.u32 %s259, 4
          %s261 = int_to_ptr.hbm [resolvable:$true] %s260
          %s262 = sshll.u32 %s252, 4
          %s263 = int_to_ptr.vmem [resolvable:$true] %s262
          %268 = dma.hbm_to_vmem [thread:$0]  %s261, 1024, %s263, %s249, 64, 64, 4
        $region24: #{tpu_custom_call.1} parent=15 // pred_fallthru
          _
        // Predicated region
        $region25: #{tpu_custom_call.1} parent=15 // pred_check
          %p269 = pneg %p118
        $region26: #{tpu_custom_call.1} parent=15 // pred_check_branch
          %271 = sbr.rel (%p269) target = $region28
        $region27: #{tpu_custom_call.1} parent=15 // pred_region
          %s272 = sand.u32 %s23, 1
          %s273 = scalar_lea.sflag [#allocation8], %s272
          %s274 = sand.u32 %s108, 1
          %s275 = smul.addr %s274, 64
          %s276 = scalar_lea.vmem [#allocation9], %s275
          %278 = vsyncadd %s273, 0
          %s279 = smul.addr %s31, 16
          %s280 = smul.addr %s30, 32
          %s281 = sadd.s32 %s279, %s280
          %s282 = smul.addr %s281, 4
          %s283 = scalar_lea.hbm %s2, %s282
          %s284 = sshll.u32 %s283, 4
          %s285 = int_to_ptr.hbm [resolvable:$true] %s284
          %s286 = sshll.u32 %s276, 4
          %s287 = int_to_ptr.vmem [resolvable:$true] %s286
          %292 = dma.hbm_to_vmem [thread:$0]  %s285, 1024, %s287, %s273, 64, 64, 4
        $region28: #{tpu_custom_call.1} parent=15 // pred_fallthru
          _
        // Predicated region
        $region29: #{tpu_custom_call.1} parent=15 // pred_check
          %p293 = pneg %p146
        $region30: #{tpu_custom_call.1} parent=15 // pred_check_branch
          %295 = sbr.rel (%p293) target = $region32
        $region31: #{tpu_custom_call.1} parent=15 // pred_region
          %s296 = sand.u32 %s23, 1
          %s297 = scalar_lea.sflag [#allocation11], %s296
          %s298 = sand.u32 %s136, 1
          %s299 = smul.addr %s298, 8
          %s300 = scalar_lea.vmem [#allocation10], %s299
          %302 = vsyncadd %s297, 0
          %s303 = smul.addr %s30, 2
          %s304 = sadd.s32 %s31, %s303
          %s305 = smul.addr %s304, 8
          %s306 = scalar_lea.hbm %s3, %s305
          %s308 = sshll.u32 %s306, 4
          %s309 = int_to_ptr.hbm [resolvable:$true] %s308
          %s310 = sshll.u32 %s300, 4
          %s311 = int_to_ptr.vmem [resolvable:$true] %s310
          %313 = dma.hbm_to_vmem [thread:$0]  %s309, 128, %s311, %s297
        $region32: #{tpu_custom_call.1} parent=15 // pred_fallthru
          _
        // Predicated region
        $region33: #{tpu_custom_call.1} parent=15 // pred_check
          %p314 = pneg %p172
        $region34: #{tpu_custom_call.1} parent=15 // pred_check_branch
          %316 = sbr.rel (%p314) target = $region36
        $region35: #{tpu_custom_call.1} parent=15 // pred_region
          %s317 = sand.u32 %s23, 1
          %s318 = scalar_lea.sflag [#allocation11], %s317
          %s319 = sand.u32 %s162, 1
          %s320 = smul.addr %s319, 8
          %s321 = scalar_lea.vmem [#allocation12], %s320
          %323 = vsyncadd %s318, 0
          %s324 = smul.addr %s30, 8
          %s325 = scalar_lea.hbm %s4, %s324
          %s327 = sshll.u32 %s325, 4
          %s328 = int_to_ptr.hbm [resolvable:$true] %s327
          %s329 = sshll.u32 %s321, 4
          %s330 = int_to_ptr.vmem [resolvable:$true] %s329
          %332 = dma.hbm_to_vmem [thread:$0]  %s328, 128, %s330, %s318
        $region36: #{tpu_custom_call.1} parent=15 // pred_fallthru
          _
      $region16: #{tpu_custom_call.1} parent=5 // pred_fallthru
        _
      %p333 = scmp.le.s32.totalorder 1, %s23
      %p334 = scmp.lt.s32.totalorder %s23, 7
      %p335 = pnand %p333, %p334
      %p336 = pneg %p335
      // Predicated region
      $region37: #{tpu_custom_call.1} parent=5 // pred_check
        _
      $region38: #{tpu_custom_call.1} parent=5 // pred_check_branch
        %338 = sbr.rel (%p335) target = $region40
      $region39: #{tpu_custom_call.1} parent=5 // pred_region
        %s339 = ssub.s32 %s23, 1
        %s340 = sand.u32 %s55, 1
        %s341 = scalar_lea.sflag [#allocation5], %s340
        %s342 = sand.u32 %s55, 1
        %s343 = smul.addr %s342, 128
        %s344 = scalar_lea.vmem [#allocation4], %s343
        // Predicated region
        $region41: #{tpu_custom_call.1} parent=39 // pred_check
          %p345 = pneg %p68
        $region42: #{tpu_custom_call.1} parent=39 // pred_check_branch
          %347 = sbr.rel (%p345) target = $region44
        $region43: #{tpu_custom_call.1} parent=39 // pred_region
          %349 = dma.done %s341, 2048
        $region44: #{tpu_custom_call.1} parent=39 // pred_fallthru
          _
        %s350 = sand.u32 %s28, 1
        %s351 = scalar_lea.sflag [#allocation8], %s350
        %s352 = sand.u32 %s83, 1
        %s353 = smul.addr %s352, 64
        %s354 = scalar_lea.vmem [#allocation7], %s353
        // Predicated region
        $region45: #{tpu_custom_call.1} parent=39 // pred_check
          %p355 = pneg %p96
        $region46: #{tpu_custom_call.1} parent=39 // pred_check_branch
          %357 = sbr.rel (%p355) target = $region48
        $region47: #{tpu_custom_call.1} parent=39 // pred_region
          %359 = dma.done %s351, 1024
        $region48: #{tpu_custom_call.1} parent=39 // pred_fallthru
          _
        %s360 = sand.u32 %s28, 1
        %s361 = scalar_lea.sflag [#allocation8], %s360
        %s362 = sand.u32 %s111, 1
        %s363 = smul.addr %s362, 64
        %s364 = scalar_lea.vmem [#allocation9], %s363
        // Predicated region
        $region49: #{tpu_custom_call.1} parent=39 // pred_check
          %p365 = pneg %p124
        $region50: #{tpu_custom_call.1} parent=39 // pred_check_branch
          %367 = sbr.rel (%p365) target = $region52
        $region51: #{tpu_custom_call.1} parent=39 // pred_region
          %369 = dma.done %s361, 1024
        $region52: #{tpu_custom_call.1} parent=39 // pred_fallthru
          _
        %s370 = sand.u32 %s28, 1
        %s371 = scalar_lea.sflag [#allocation11], %s370
        %s372 = sand.u32 %s139, 1
        %s373 = smul.addr %s372, 8
        %s374 = scalar_lea.vmem [#allocation10], %s373
        // Predicated region
        $region53: #{tpu_custom_call.1} parent=39 // pred_check
          %p375 = pneg %p152
        $region54: #{tpu_custom_call.1} parent=39 // pred_check_branch
          %377 = sbr.rel (%p375) target = $region56
        $region55: #{tpu_custom_call.1} parent=39 // pred_region
          %379 = dma.done %s371, 128
        $region56: #{tpu_custom_call.1} parent=39 // pred_fallthru
          _
        %s380 = sand.u32 %s28, 1
        %s381 = scalar_lea.sflag [#allocation11], %s380
        %s382 = sand.u32 %s165, 1
        %s383 = smul.addr %s382, 8
        %s384 = scalar_lea.vmem [#allocation12], %s383
        // Predicated region
        $region57: #{tpu_custom_call.1} parent=39 // pred_check
          %p385 = pneg %p178
        $region58: #{tpu_custom_call.1} parent=39 // pred_check_branch
          %387 = sbr.rel (%p385) target = $region60
        $region59: #{tpu_custom_call.1} parent=39 // pred_region
          %389 = dma.done %s381, 128
        $region60: #{tpu_custom_call.1} parent=39 // pred_fallthru
          _
        %s390 = sand.u32 %s55, 1
        %s391 = scalar_lea.sflag [#allocation5], %s390
        %s392 = sand.u32 %s55, 1
        %s393 = smul.addr %s392, 128
        %s394 = scalar_lea.vmem [#allocation4], %s393
        %p395 = pneg %p68
        %p396 = pneg %p65
        %s397 = sand.u32 %s28, 1
        %s398 = scalar_lea.sflag [#allocation8], %s397
        %s399 = sand.u32 %s83, 1
        %s400 = smul.addr %s399, 64
        %s401 = scalar_lea.vmem [#allocation7], %s400
        %p402 = pneg %p96
        %p403 = pneg %p93
        %s404 = sand.u32 %s28, 1
        %s405 = scalar_lea.sflag [#allocation8], %s404
        %s406 = sand.u32 %s111, 1
        %s407 = smul.addr %s406, 64
        %s408 = scalar_lea.vmem [#allocation9], %s407
        %p409 = pneg %p124
        %p410 = pneg %p121
        %s411 = sand.u32 %s28, 1
        %s412 = scalar_lea.sflag [#allocation11], %s411
        %s413 = sand.u32 %s139, 1
        %s414 = smul.addr %s413, 8
        %s415 = scalar_lea.vmem [#allocation10], %s414
        %p416 = pneg %p152
        %p417 = pneg %p149
        %s418 = sand.u32 %s28, 1
        %s419 = scalar_lea.sflag [#allocation11], %s418
        %s420 = sand.u32 %s165, 1
        %s421 = smul.addr %s420, 8
        %s422 = scalar_lea.vmem [#allocation12], %s421
        %p423 = pneg %p178
        %p424 = pneg %p175
        %p425 = pneg %p204
        %p426 = pneg %p201
        %s427 = sand.u32 %s191, 1
        %s428 = scalar_lea.sflag [#allocation6], %s427
        %s429 = sand.u32 %s191, 1
        %s430 = smul.addr %s429, 8
        %s431 = scalar_lea.vmem [#allocation13], %s430
        %s432 = smul.u32 16, %s35
        %p433 = scmp.eq.s32.totalorder %s34, 0
        %p434 = scmp.eq.s32.totalorder %s35, 0
        %p435 = pnand %p433, %p434
        %p436 = pneg %p435
        // Predicated region
        $region61: #{tpu_custom_call.1} parent=39 // pred_check
          _
        $region62: #{tpu_custom_call.1} parent=39 // pred_check_branch
          %438 = sbr.rel (%p435) target = $region64
        $region63: #{tpu_custom_call.1} parent=39 // pred_region
          %v439 = vld [vmem:[%s344] sm:$0xff]
          %v440 = vld [vmem:[%s344 + $0x8] sm:$0xff]
          %v441 = vld [vmem:[%s344 + $0x10] sm:$0xff]
          %v442 = vld [vmem:[%s344 + $0x18] sm:$0xff]
          %v443 = vld [vmem:[%s344 + $0x20] sm:$0xff]
          %v444 = vld [vmem:[%s344 + $0x28] sm:$0xff]
          %v445 = vld [vmem:[%s344 + $0x30] sm:$0xff]
          %v446 = vld [vmem:[%s344 + $0x38] sm:$0xff]
          %v447 = vld [vmem:[%s344 + $0x40] sm:$0xff]
          %v448 = vld [vmem:[%s344 + $0x48] sm:$0xff]
          %v449 = vld [vmem:[%s344 + $0x50] sm:$0xff]
          %v450 = vld [vmem:[%s344 + $0x58] sm:$0xff]
          %v451 = vld [vmem:[%s344 + $0x60] sm:$0xff]
          %v452 = vld [vmem:[%s344 + $0x68] sm:$0xff]
          %v453 = vld [vmem:[%s344 + $0x70] sm:$0xff]
          %v454 = vld [vmem:[%s344 + $0x78] sm:$0xff]
          %455 = vst [vmem:[#allocation2] sm:$0xff] %v439
          %456 = vst [vmem:[#allocation2 + $0x8] sm:$0xff] %v440
          %457 = vst [vmem:[#allocation2 + $0x10] sm:$0xff] %v441
          %458 = vst [vmem:[#allocation2 + $0x18] sm:$0xff] %v442
          %459 = vst [vmem:[#allocation2 + $0x20] sm:$0xff] %v443
          %460 = vst [vmem:[#allocation2 + $0x28] sm:$0xff] %v444
          %461 = vst [vmem:[#allocation2 + $0x30] sm:$0xff] %v445
          %462 = vst [vmem:[#allocation2 + $0x38] sm:$0xff] %v446
          %463 = vst [vmem:[#allocation2 + $0x40] sm:$0xff] %v447
          %464 = vst [vmem:[#allocation2 + $0x48] sm:$0xff] %v448
          %465 = vst [vmem:[#allocation2 + $0x50] sm:$0xff] %v449
          %466 = vst [vmem:[#allocation2 + $0x58] sm:$0xff] %v450
          %467 = vst [vmem:[#allocation2 + $0x60] sm:$0xff] %v451
          %468 = vst [vmem:[#allocation2 + $0x68] sm:$0xff] %v452
          %469 = vst [vmem:[#allocation2 + $0x70] sm:$0xff] %v453
          %470 = vst [vmem:[#allocation2 + $0x78] sm:$0xff] %v454
        $region64: #{tpu_custom_call.1} parent=39 // pred_fallthru
          _
        // Predicated region
        $region65: #{tpu_custom_call.1} parent=39 // pred_check
          %p471 = pneg %p434
        $region66: #{tpu_custom_call.1} parent=39 // pred_check_branch
          %473 = sbr.rel (%p471) target = $region68
        $region67: #{tpu_custom_call.1} parent=39 // pred_region
          %v474 = vld [vmem:[#allocation2] sm:$0xff]
          %v475 = vld [vmem:[#allocation2 + $0x8] sm:$0xff]
          %v476 = vld [vmem:[#allocation2 + $0x10] sm:$0xff]
          %v477 = vld [vmem:[#allocation2 + $0x18] sm:$0xff]
          %v478 = vld [vmem:[#allocation2 + $0x20] sm:$0xff]
          %v479 = vld [vmem:[#allocation2 + $0x28] sm:$0xff]
          %v480 = vld [vmem:[#allocation2 + $0x30] sm:$0xff]
          %v481 = vld [vmem:[#allocation2 + $0x38] sm:$0xff]
          %v482 = vld [vmem:[#allocation2 + $0x40] sm:$0xff]
          %v483 = vld [vmem:[#allocation2 + $0x48] sm:$0xff]
          %v484 = vld [vmem:[#allocation2 + $0x50] sm:$0xff]
          %v485 = vld [vmem:[#allocation2 + $0x58] sm:$0xff]
          %v486 = vld [vmem:[#allocation2 + $0x60] sm:$0xff]
          %v487 = vld [vmem:[#allocation2 + $0x68] sm:$0xff]
          %v488 = vld [vmem:[#allocation2 + $0x70] sm:$0xff]
          %v489 = vld [vmem:[#allocation2 + $0x78] sm:$0xff]
          %v490 = vpack.c.bf16 %v475, %v474
          %v491 = vpack.c.bf16 %v477, %v476
          %v492 = vpack.c.bf16 %v479, %v478
          %v493 = vpack.c.bf16 %v481, %v480
          %v494 = vpack.c.bf16 %v483, %v482
          %v495 = vpack.c.bf16 %v485, %v484
          %v496 = vpack.c.bf16 %v487, %v486
          %v497 = vpack.c.bf16 %v489, %v488
          %v498 = vld [vmem:[%s364] sm:$0xf]
          %v499 = vld [vmem:[%s364 + $0x4] sm:$0xf]
          %v500 = vld [vmem:[%s364 + $0x8] sm:$0xf]
          %v501 = vld [vmem:[%s364 + $0xc] sm:$0xf]
          %v502 = vld [vmem:[%s364 + $0x10] sm:$0xf]
          %v503 = vld [vmem:[%s364 + $0x14] sm:$0xf]
          %v504 = vld [vmem:[%s364 + $0x18] sm:$0xf]
          %v505 = vld [vmem:[%s364 + $0x1c] sm:$0xf]
          %v506 = vld [vmem:[%s364 + $0x20] sm:$0xf]
          %v507 = vld [vmem:[%s364 + $0x24] sm:$0xf]
          %v508 = vld [vmem:[%s364 + $0x28] sm:$0xf]
          %v509 = vld [vmem:[%s364 + $0x2c] sm:$0xf]
          %v510 = vld [vmem:[%s364 + $0x30] sm:$0xf]
          %v511 = vld [vmem:[%s364 + $0x34] sm:$0xf]
          %v512 = vld [vmem:[%s364 + $0x38] sm:$0xf]
          %v513 = vld [vmem:[%s364 + $0x3c] sm:$0xf]
          %v530 = vunpack.c.l.b16 %v498
          %v531 = vunpack.c.l.b16 %v499
          %v532 = vunpack.c.l.b16 %v500
          %v533 = vunpack.c.l.b16 %v501
          %v534 = vunpack.c.l.b16 %v502
          %v535 = vunpack.c.l.b16 %v503
          %v536 = vunpack.c.l.b16 %v504
          %v537 = vunpack.c.l.b16 %v505
          %v538 = vunpack.c.l.b16 %v506
          %v539 = vunpack.c.l.b16 %v507
          %v540 = vunpack.c.l.b16 %v508
          %v541 = vunpack.c.l.b16 %v509
          %v542 = vunpack.c.l.b16 %v510
          %v543 = vunpack.c.l.b16 %v511
          %v544 = vunpack.c.l.b16 %v512
          %v545 = vunpack.c.l.b16 %v513
          %v546 = vpack.c.b16 %v531, %v530
          %v547 = vpack.c.b16 %v533, %v532
          %v548 = vpack.c.b16 %v535, %v534
          %v549 = vpack.c.b16 %v537, %v536
          %v550 = vpack.c.b16 %v539, %v538
          %v551 = vpack.c.b16 %v541, %v540
          %v552 = vpack.c.b16 %v543, %v542
          %v553 = vpack.c.b16 %v545, %v544
          %562 = vmatpush.bf16.msra.mxu0 %v553
          %563 = vmatpush.bf16.msra.mxu0 %v552
          %564 = vmatpush.bf16.msra.mxu0 %v551
          %565 = vmatpush.bf16.msra.mxu0 %v550
          %566 = vmatpush.bf16.msra.mxu0 %v549
          %567 = vmatpush.bf16.msra.mxu0 %v548
          %568 = vmatpush.bf16.msra.mxu0 %v547
          %569 = vmatpush.bf16.msra.mxu0 %v546
          %570 = vmatmul.bf16.gmra.mxu0 %v490
          %v571 = vpop.f32.mrf.mxu0
          %v572 = vadd.f32 0.0, %v571
          %v573 = vpop.f32.mrf.mxu0
          %v574 = vadd.f32 0.0, %v573
          %575 = vmatmul.bf16.gmra.mxu0 %v491
          %v576 = vpop.f32.mrf.mxu0
          %v577 = vadd.f32 0.0, %v576
          %v578 = vpop.f32.mrf.mxu0
          %v579 = vadd.f32 0.0, %v578
          %580 = vmatmul.bf16.gmra.mxu0 %v492
          %v581 = vpop.f32.mrf.mxu0
          %v582 = vadd.f32 0.0, %v581
          %v583 = vpop.f32.mrf.mxu0
          %v584 = vadd.f32 0.0, %v583
          %585 = vmatmul.bf16.gmra.mxu0 %v493
          %v586 = vpop.f32.mrf.mxu0
          %v587 = vadd.f32 0.0, %v586
          %v588 = vpop.f32.mrf.mxu0
          %v589 = vadd.f32 0.0, %v588
          %590 = vmatmul.bf16.gmra.mxu0 %v494
          %v591 = vpop.f32.mrf.mxu0
          %v592 = vadd.f32 0.0, %v591
          %v593 = vpop.f32.mrf.mxu0
          %v594 = vadd.f32 0.0, %v593
          %595 = vmatmul.bf16.gmra.mxu0 %v495
          %v596 = vpop.f32.mrf.mxu0
          %v597 = vadd.f32 0.0, %v596
          %v598 = vpop.f32.mrf.mxu0
          %v599 = vadd.f32 0.0, %v598
          %600 = vmatmul.bf16.gmra.mxu0 %v496
          %v601 = vpop.f32.mrf.mxu0
          %v602 = vadd.f32 0.0, %v601
          %v603 = vpop.f32.mrf.mxu0
          %v604 = vadd.f32 0.0, %v603
          %605 = vmatmul.bf16.gmra.mxu0 %v497
          %v606 = vpop.f32.mrf.mxu0
          %v607 = vadd.f32 0.0, %v606
          %v608 = vpop.f32.mrf.mxu0
          %v609 = vadd.f32 0.0, %v608
          %610 = vdwg.mxu0
          %v611 = vpack.c.bf16 %v572, %v572
          %v612 = vpack.c.bf16 %v574, %v574
          %v613 = vpack.c.bf16 %v577, %v577
          %v614 = vpack.c.bf16 %v579, %v579
          %v615 = vpack.c.bf16 %v582, %v582
          %v616 = vpack.c.bf16 %v584, %v584
          %v617 = vpack.c.bf16 %v587, %v587
          %v618 = vpack.c.bf16 %v589, %v589
          %v619 = vpack.c.bf16 %v592, %v592
          %v620 = vpack.c.bf16 %v594, %v594
          %v621 = vpack.c.bf16 %v597, %v597
          %v622 = vpack.c.bf16 %v599, %v599
          %v623 = vpack.c.bf16 %v602, %v602
          %v624 = vpack.c.bf16 %v604, %v604
          %v625 = vpack.c.bf16 %v607, %v607
          %v626 = vpack.c.bf16 %v609, %v609
          %627 = vst [vmem:[#allocation3] sm:$0xf] %v611
          %628 = vst [vmem:[#allocation3 + $0x4] sm:$0xf] %v612
          %629 = vst [vmem:[#allocation3 + $0x8] sm:$0xf] %v613
          %630 = vst [vmem:[#allocation3 + $0xc] sm:$0xf] %v614
          %631 = vst [vmem:[#allocation3 + $0x10] sm:$0xf] %v615
          %632 = vst [vmem:[#allocation3 + $0x14] sm:$0xf] %v616
          %633 = vst [vmem:[#allocation3 + $0x18] sm:$0xf] %v617
          %634 = vst [vmem:[#allocation3 + $0x1c] sm:$0xf] %v618
          %635 = vst [vmem:[#allocation3 + $0x20] sm:$0xf] %v619
          %636 = vst [vmem:[#allocation3 + $0x24] sm:$0xf] %v620
          %637 = vst [vmem:[#allocation3 + $0x28] sm:$0xf] %v621
          %638 = vst [vmem:[#allocation3 + $0x2c] sm:$0xf] %v622
          %639 = vst [vmem:[#allocation3 + $0x30] sm:$0xf] %v623
          %640 = vst [vmem:[#allocation3 + $0x34] sm:$0xf] %v624
          %641 = vst [vmem:[#allocation3 + $0x38] sm:$0xf] %v625
          %642 = vst [vmem:[#allocation3 + $0x3c] sm:$0xf] %v626
        $region68: #{tpu_custom_call.1} parent=39 // pred_fallthru
          _
        %v643 = vld [vmem:[%s354] sm:$0xf]
        %v644 = vld [vmem:[%s354 + $0x4] sm:$0xf]
        %v645 = vld [vmem:[%s354 + $0x8] sm:$0xf]
        %v646 = vld [vmem:[%s354 + $0xc] sm:$0xf]
        %v647 = vld [vmem:[%s354 + $0x10] sm:$0xf]
        %v648 = vld [vmem:[%s354 + $0x14] sm:$0xf]
        %v649 = vld [vmem:[%s354 + $0x18] sm:$0xf]
        %v650 = vld [vmem:[%s354 + $0x1c] sm:$0xf]
        %v651 = vld [vmem:[%s354 + $0x20] sm:$0xf]
        %v652 = vld [vmem:[%s354 + $0x24] sm:$0xf]
        %v653 = vld [vmem:[%s354 + $0x28] sm:$0xf]
        %v654 = vld [vmem:[%s354 + $0x2c] sm:$0xf]
        %v655 = vld [vmem:[%s354 + $0x30] sm:$0xf]
        %v656 = vld [vmem:[%s354 + $0x34] sm:$0xf]
        %v657 = vld [vmem:[%s354 + $0x38] sm:$0xf]
        %v658 = vld [vmem:[%s354 + $0x3c] sm:$0xf]
        %v659 = vld [vmem:[#allocation3] sm:$0xf]
        %v660 = vld [vmem:[#allocation3 + $0x4] sm:$0xf]
        %v661 = vld [vmem:[#allocation3 + $0x8] sm:$0xf]
        %v662 = vld [vmem:[#allocation3 + $0xc] sm:$0xf]
        %v663 = vld [vmem:[#allocation3 + $0x10] sm:$0xf]
        %v664 = vld [vmem:[#allocation3 + $0x14] sm:$0xf]
        %v665 = vld [vmem:[#allocation3 + $0x18] sm:$0xf]
        %v666 = vld [vmem:[#allocation3 + $0x1c] sm:$0xf]
        %v667 = vld [vmem:[#allocation3 + $0x20] sm:$0xf]
        %v668 = vld [vmem:[#allocation3 + $0x24] sm:$0xf]
        %v669 = vld [vmem:[#allocation3 + $0x28] sm:$0xf]
        %v670 = vld [vmem:[#allocation3 + $0x2c] sm:$0xf]
        %v671 = vld [vmem:[#allocation3 + $0x30] sm:$0xf]
        %v672 = vld [vmem:[#allocation3 + $0x34] sm:$0xf]
        %v673 = vld [vmem:[#allocation3 + $0x38] sm:$0xf]
        %v674 = vld [vmem:[#allocation3 + $0x3c] sm:$0xf]
        %v675 = vld [vmem:[%s374] sm:$0x1]
        %v676 = vperm.slane %v675, 0
        %v693 = vunpack.c.l.b16 %v643
        %v694 = vunpack.c.l.b16 %v644
        %v695 = vunpack.c.l.b16 %v645
        %v696 = vunpack.c.l.b16 %v646
        %v697 = vunpack.c.l.b16 %v647
        %v698 = vunpack.c.l.b16 %v648
        %v699 = vunpack.c.l.b16 %v649
        %v700 = vunpack.c.l.b16 %v650
        %v701 = vunpack.c.l.b16 %v651
        %v702 = vunpack.c.l.b16 %v652
        %v703 = vunpack.c.l.b16 %v653
        %v704 = vunpack.c.l.b16 %v654
        %v705 = vunpack.c.l.b16 %v655
        %v706 = vunpack.c.l.b16 %v656
        %v707 = vunpack.c.l.b16 %v657
        %v708 = vunpack.c.l.b16 %v658
        %v709 = vpack.c.b16 %v694, %v693
        %v710 = vpack.c.b16 %v696, %v695
        %v711 = vpack.c.b16 %v698, %v697
        %v712 = vpack.c.b16 %v700, %v699
        %v713 = vpack.c.b16 %v702, %v701
        %v714 = vpack.c.b16 %v704, %v703
        %v715 = vpack.c.b16 %v706, %v705
        %v716 = vpack.c.b16 %v708, %v707
        %v741 = vunpack.c.l.b16 %v659
        %v742 = vunpack.c.l.b16 %v660
        %v743 = vunpack.c.l.b16 %v661
        %v744 = vunpack.c.l.b16 %v662
        %v745 = vunpack.c.l.b16 %v663
        %v746 = vunpack.c.l.b16 %v664
        %v747 = vunpack.c.l.b16 %v665
        %v748 = vunpack.c.l.b16 %v666
        %v749 = vunpack.c.l.b16 %v667
        %v750 = vunpack.c.l.b16 %v668
        %v751 = vunpack.c.l.b16 %v669
        %v752 = vunpack.c.l.b16 %v670
        %v753 = vunpack.c.l.b16 %v671
        %v754 = vunpack.c.l.b16 %v672
        %v755 = vunpack.c.l.b16 %v673
        %v756 = vunpack.c.l.b16 %v674
        %v757 = vpack.c.b16 %v742, %v741
        %v758 = vpack.c.b16 %v744, %v743
        %v759 = vpack.c.b16 %v746, %v745
        %v760 = vpack.c.b16 %v748, %v747
        %v761 = vpack.c.b16 %v750, %v749
        %v762 = vpack.c.b16 %v752, %v751
        %v763 = vpack.c.b16 %v754, %v753
        %v764 = vpack.c.b16 %v756, %v755
        %773 = vmatpush.bf16.msra.mxu0 %v764
        %774 = vmatpush.bf16.msra.mxu0 %v763
        %775 = vmatpush.bf16.msra.mxu0 %v762
        %776 = vmatpush.bf16.msra.mxu0 %v761
        %777 = vmatpush.bf16.msra.mxu0 %v760
        %778 = vmatpush.bf16.msra.mxu0 %v759
        %779 = vmatpush.bf16.msra.mxu0 %v758
        %780 = vmatpush.bf16.msra.mxu0 %v757
        %781 = vmatmul.bf16.gmra.mxu0 %v709
        %v782 = vpop.f32.mrf.mxu0
        %v783 = vadd.f32 %v676, %v782
        %v784 = vpop.f32.mrf.mxu0
        %v785 = vadd.f32 %v676, %v784
        %786 = vmatmul.bf16.gmra.mxu0 %v710
        %v787 = vpop.f32.mrf.mxu0
        %v788 = vadd.f32 %v676, %v787
        %v789 = vpop.f32.mrf.mxu0
        %v790 = vadd.f32 %v676, %v789
        %791 = vmatmul.bf16.gmra.mxu0 %v711
        %v792 = vpop.f32.mrf.mxu0
        %v793 = vadd.f32 %v676, %v792
        %v794 = vpop.f32.mrf.mxu0
        %v795 = vadd.f32 %v676, %v794
        %796 = vmatmul.bf16.gmra.mxu0 %v712
        %v797 = vpop.f32.mrf.mxu0
        %v798 = vadd.f32 %v676, %v797
        %v799 = vpop.f32.mrf.mxu0
        %v800 = vadd.f32 %v676, %v799
        %801 = vmatmul.bf16.gmra.mxu0 %v713
        %v802 = vpop.f32.mrf.mxu0
        %v803 = vadd.f32 %v676, %v802
        %v804 = vpop.f32.mrf.mxu0
        %v805 = vadd.f32 %v676, %v804
        %806 = vmatmul.bf16.gmra.mxu0 %v714
        %v807 = vpop.f32.mrf.mxu0
        %v808 = vadd.f32 %v676, %v807
        %v809 = vpop.f32.mrf.mxu0
        %v810 = vadd.f32 %v676, %v809
        %811 = vmatmul.bf16.gmra.mxu0 %v715
        %v812 = vpop.f32.mrf.mxu0
        %v813 = vadd.f32 %v676, %v812
        %v814 = vpop.f32.mrf.mxu0
        %v815 = vadd.f32 %v676, %v814
        %816 = vmatmul.bf16.gmra.mxu0 %v716
        %v817 = vpop.f32.mrf.mxu0
        %v818 = vadd.f32 %v676, %v817
        %v819 = vpop.f32.mrf.mxu0
        %v820 = vadd.f32 %v676, %v819
        %821 = vdwg.mxu0
        %v822 = vld [vmem:[%s374 + $0x3] sm:$0x1]
        %823 = vadd.xlane.f32.xlu0 %v783
        %v824 = vpop.xlane.xlu0 %823
        %825 = vadd.xlane.f32.xlu0 %v785
        %v826 = vpop.xlane.xlu0 %825
        %827 = vadd.xlane.f32.xlu0 %v788
        %v828 = vpop.xlane.xlu0 %827
        %829 = vadd.xlane.f32.xlu0 %v790
        %v830 = vpop.xlane.xlu0 %829
        %831 = vadd.xlane.f32.xlu0 %v793
        %v832 = vpop.xlane.xlu0 %831
        %833 = vadd.xlane.f32.xlu0 %v795
        %v834 = vpop.xlane.xlu0 %833
        %835 = vadd.xlane.f32.xlu0 %v798
        %v836 = vpop.xlane.xlu0 %835
        %837 = vadd.xlane.f32.xlu0 %v800
        %v838 = vpop.xlane.xlu0 %837
        %839 = vadd.xlane.f32.xlu0 %v803
        %v840 = vpop.xlane.xlu0 %839
        %841 = vadd.xlane.f32.xlu0 %v805
        %v842 = vpop.xlane.xlu0 %841
        %843 = vadd.xlane.f32.xlu0 %v808
        %v844 = vpop.xlane.xlu0 %843
        %845 = vadd.xlane.f32.xlu0 %v810
        %v846 = vpop.xlane.xlu0 %845
        %847 = vadd.xlane.f32.xlu0 %v813
        %v848 = vpop.xlane.xlu0 %847
        %849 = vadd.xlane.f32.xlu0 %v815
        %v850 = vpop.xlane.xlu0 %849
        %851 = vadd.xlane.f32.xlu0 %v818
        %v852 = vpop.xlane.xlu0 %851
        %853 = vadd.xlane.f32.xlu0 %v820
        %v854 = vpop.xlane.xlu0 %853
        %v855 = vmul.f32 %v824, 0.03125
        %v856 = vmul.f32 %v826, 0.03125
        %v857 = vmul.f32 %v828, 0.03125
        %v858 = vmul.f32 %v830, 0.03125
        %v859 = vmul.f32 %v832, 0.03125
        %v860 = vmul.f32 %v834, 0.03125
        %v861 = vmul.f32 %v836, 0.03125
        %v862 = vmul.f32 %v838, 0.03125
        %v863 = vmul.f32 %v840, 0.03125
        %v864 = vmul.f32 %v842, 0.03125
        %v865 = vmul.f32 %v844, 0.03125
        %v866 = vmul.f32 %v846, 0.03125
        %v867 = vmul.f32 %v848, 0.03125
        %v868 = vmul.f32 %v850, 0.03125
        %v869 = vmul.f32 %v852, 0.03125
        %v870 = vmul.f32 %v854, 0.03125
        %v871 = vsub.f32 %v783, %v855
        %v872 = vsub.f32 %v785, %v856
        %v873 = vsub.f32 %v788, %v857
        %v874 = vsub.f32 %v790, %v858
        %v875 = vsub.f32 %v793, %v859
        %v876 = vsub.f32 %v795, %v860
        %v877 = vsub.f32 %v798, %v861
        %v878 = vsub.f32 %v800, %v862
        %v879 = vsub.f32 %v803, %v863
        %v880 = vsub.f32 %v805, %v864
        %v881 = vsub.f32 %v808, %v865
        %v882 = vsub.f32 %v810, %v866
        %v883 = vsub.f32 %v813, %v867
        %v884 = vsub.f32 %v815, %v868
        %v885 = vsub.f32 %v818, %v869
        %v886 = vsub.f32 %v820, %v870
        %v887 = vperm.slane %v822, 0
        %v888 = vmul.f32 %v871, %v887
        %v889 = vmul.f32 %v872, %v887
        %v890 = vmul.f32 %v873, %v887
        %v891 = vmul.f32 %v874, %v887
        %v892 = vmul.f32 %v875, %v887
        %v893 = vmul.f32 %v876, %v887
        %v894 = vmul.f32 %v877, %v887
        %v895 = vmul.f32 %v878, %v887
        %v896 = vmul.f32 %v879, %v887
        %v897 = vmul.f32 %v880, %v887
        %v898 = vmul.f32 %v881, %v887
        %v899 = vmul.f32 %v882, %v887
        %v900 = vmul.f32 %v883, %v887
        %v901 = vmul.f32 %v884, %v887
        %v902 = vmul.f32 %v885, %v887
        %v903 = vmul.f32 %v886, %v887
        %v904 = vmul.f32 %v888, %v888
        %v905 = vmul.f32 %v889, %v889
        %v906 = vmul.f32 %v890, %v890
        %v907 = vmul.f32 %v891, %v891
        %v908 = vmul.f32 %v892, %v892
        %v909 = vmul.f32 %v893, %v893
        %v910 = vmul.f32 %v894, %v894
        %v911 = vmul.f32 %v895, %v895
        %v912 = vmul.f32 %v896, %v896
        %v913 = vmul.f32 %v897, %v897
        %v914 = vmul.f32 %v898, %v898
        %v915 = vmul.f32 %v899, %v899
        %v916 = vmul.f32 %v900, %v900
        %v917 = vmul.f32 %v901, %v901
        %v918 = vmul.f32 %v902, %v902
        %v919 = vmul.f32 %v903, %v903
        %920 = vadd.xlane.f32.xlu0 %v904
        %v921 = vpop.xlane.xlu0 %920
        %922 = vadd.xlane.f32.xlu0 %v905
        %v923 = vpop.xlane.xlu0 %922
        %924 = vadd.xlane.f32.xlu0 %v906
        %v925 = vpop.xlane.xlu0 %924
        %926 = vadd.xlane.f32.xlu0 %v907
        %v927 = vpop.xlane.xlu0 %926
        %928 = vadd.xlane.f32.xlu0 %v908
        %v929 = vpop.xlane.xlu0 %928
        %930 = vadd.xlane.f32.xlu0 %v909
        %v931 = vpop.xlane.xlu0 %930
        %932 = vadd.xlane.f32.xlu0 %v910
        %v933 = vpop.xlane.xlu0 %932
        %934 = vadd.xlane.f32.xlu0 %v911
        %v935 = vpop.xlane.xlu0 %934
        %936 = vadd.xlane.f32.xlu0 %v912
        %v937 = vpop.xlane.xlu0 %936
        %938 = vadd.xlane.f32.xlu0 %v913
        %v939 = vpop.xlane.xlu0 %938
        %940 = vadd.xlane.f32.xlu0 %v914
        %v941 = vpop.xlane.xlu0 %940
        %942 = vadd.xlane.f32.xlu0 %v915
        %v943 = vpop.xlane.xlu0 %942
        %944 = vadd.xlane.f32.xlu0 %v916
        %v945 = vpop.xlane.xlu0 %944
        %946 = vadd.xlane.f32.xlu0 %v917
        %v947 = vpop.xlane.xlu0 %946
        %948 = vadd.xlane.f32.xlu0 %v918
        %v949 = vpop.xlane.xlu0 %948
        %950 = vadd.xlane.f32.xlu0 %v919
        %v951 = vpop.xlane.xlu0 %950
        %v952 = vmul.f32 %v921, 0.03125
        %v953 = vmul.f32 %v923, 0.03125
        %v954 = vmul.f32 %v925, 0.03125
        %v955 = vmul.f32 %v927, 0.03125
        %v956 = vmul.f32 %v929, 0.03125
        %v957 = vmul.f32 %v931, 0.03125
        %v958 = vmul.f32 %v933, 0.03125
        %v959 = vmul.f32 %v935, 0.03125
        %v960 = vmul.f32 %v937, 0.03125
        %v961 = vmul.f32 %v939, 0.03125
        %v962 = vmul.f32 %v941, 0.03125
        %v963 = vmul.f32 %v943, 0.03125
        %v964 = vmul.f32 %v945, 0.03125
        %v965 = vmul.f32 %v947, 0.03125
        %v966 = vmul.f32 %v949, 0.03125
        %v967 = vmul.f32 %v951, 0.03125
        %v968 = vadd.f32 %v952, 1e-05
        %v969 = vadd.f32 %v953, 1e-05
        %v970 = vadd.f32 %v954, 1e-05
        %v971 = vadd.f32 %v955, 1e-05
        %v972 = vadd.f32 %v956, 1e-05
        %v973 = vadd.f32 %v957, 1e-05
        %v974 = vadd.f32 %v958, 1e-05
        %v975 = vadd.f32 %v959, 1e-05
        %v976 = vadd.f32 %v960, 1e-05
        %v977 = vadd.f32 %v961, 1e-05
        %v978 = vadd.f32 %v962, 1e-05
        %v979 = vadd.f32 %v963, 1e-05
        %v980 = vadd.f32 %v964, 1e-05
        %v981 = vadd.f32 %v965, 1e-05
        %v982 = vadd.f32 %v966, 1e-05
        %v983 = vadd.f32 %v967, 1e-05
        %v984 = vrsqrt.pop %v968
        %v985 = vmul.f32 %v984, %v968
        %v986 = vmul.f32 %v985, %v984
        %v987 = vmul.f32 0.5, %v986
        %v988 = vsub.f32 1.5, %v987
        %v989 = vmul.f32 %v984, %v988
        %vm990 = vweird.f32 %v968
        %vm991 = vweird.f32 %v984
        %vm992 = vmor %vm990, %vm991
        %v993 = vsel %vm992, %v984, %v989
        %v994 = vrsqrt.pop %v969
        %v995 = vmul.f32 %v994, %v969
        %v996 = vmul.f32 %v995, %v994
        %v997 = vmul.f32 0.5, %v996
        %v998 = vsub.f32 1.5, %v997
        %v999 = vmul.f32 %v994, %v998
        %vm1000 = vweird.f32 %v969
        %vm1001 = vweird.f32 %v994
        %vm1002 = vmor %vm1000, %vm1001
        %v1003 = vsel %vm1002, %v994, %v999
        %v1004 = vrsqrt.pop %v970
        %v1005 = vmul.f32 %v1004, %v970
        %v1006 = vmul.f32 %v1005, %v1004
        %v1007 = vmul.f32 0.5, %v1006
        %v1008 = vsub.f32 1.5, %v1007
        %v1009 = vmul.f32 %v1004, %v1008
        %vm1010 = vweird.f32 %v970
        %vm1011 = vweird.f32 %v1004
        %vm1012 = vmor %vm1010, %vm1011
        %v1013 = vsel %vm1012, %v1004, %v1009
        %v1014 = vrsqrt.pop %v971
        %v1015 = vmul.f32 %v1014, %v971
        %v1016 = vmul.f32 %v1015, %v1014
        %v1017 = vmul.f32 0.5, %v1016
        %v1018 = vsub.f32 1.5, %v1017
        %v1019 = vmul.f32 %v1014, %v1018
        %vm1020 = vweird.f32 %v971
        %vm1021 = vweird.f32 %v1014
        %vm1022 = vmor %vm1020, %vm1021
        %v1023 = vsel %vm1022, %v1014, %v1019
        %v1024 = vrsqrt.pop %v972
        %v1025 = vmul.f32 %v1024, %v972
        %v1026 = vmul.f32 %v1025, %v1024
        %v1027 = vmul.f32 0.5, %v1026
        %v1028 = vsub.f32 1.5, %v1027
        %v1029 = vmul.f32 %v1024, %v1028
        %vm1030 = vweird.f32 %v972
        %vm1031 = vweird.f32 %v1024
        %vm1032 = vmor %vm1030, %vm1031
        %v1033 = vsel %vm1032, %v1024, %v1029
        %v1034 = vrsqrt.pop %v973
        %v1035 = vmul.f32 %v1034, %v973
        %v1036 = vmul.f32 %v1035, %v1034
        %v1037 = vmul.f32 0.5, %v1036
        %v1038 = vsub.f32 1.5, %v1037
        %v1039 = vmul.f32 %v1034, %v1038
        %vm1040 = vweird.f32 %v973
        %vm1041 = vweird.f32 %v1034
        %vm1042 = vmor %vm1040, %vm1041
        %v1043 = vsel %vm1042, %v1034, %v1039
        %v1044 = vrsqrt.pop %v974
        %v1045 = vmul.f32 %v1044, %v974
        %v1046 = vmul.f32 %v1045, %v1044
        %v1047 = vmul.f32 0.5, %v1046
        %v1048 = vsub.f32 1.5, %v1047
        %v1049 = vmul.f32 %v1044, %v1048
        %vm1050 = vweird.f32 %v974
        %vm1051 = vweird.f32 %v1044
        %vm1052 = vmor %vm1050, %vm1051
        %v1053 = vsel %vm1052, %v1044, %v1049
        %v1054 = vrsqrt.pop %v975
        %v1055 = vmul.f32 %v1054, %v975
        %v1056 = vmul.f32 %v1055, %v1054
        %v1057 = vmul.f32 0.5, %v1056
        %v1058 = vsub.f32 1.5, %v1057
        %v1059 = vmul.f32 %v1054, %v1058
        %vm1060 = vweird.f32 %v975
        %vm1061 = vweird.f32 %v1054
        %vm1062 = vmor %vm1060, %vm1061
        %v1063 = vsel %vm1062, %v1054, %v1059
        %v1064 = vrsqrt.pop %v976
        %v1065 = vmul.f32 %v1064, %v976
        %v1066 = vmul.f32 %v1065, %v1064
        %v1067 = vmul.f32 0.5, %v1066
        %v1068 = vsub.f32 1.5, %v1067
        %v1069 = vmul.f32 %v1064, %v1068
        %vm1070 = vweird.f32 %v976
        %vm1071 = vweird.f32 %v1064
        %vm1072 = vmor %vm1070, %vm1071
        %v1073 = vsel %vm1072, %v1064, %v1069
        %v1074 = vrsqrt.pop %v977
        %v1075 = vmul.f32 %v1074, %v977
        %v1076 = vmul.f32 %v1075, %v1074
        %v1077 = vmul.f32 0.5, %v1076
        %v1078 = vsub.f32 1.5, %v1077
        %v1079 = vmul.f32 %v1074, %v1078
        %vm1080 = vweird.f32 %v977
        %vm1081 = vweird.f32 %v1074
        %vm1082 = vmor %vm1080, %vm1081
        %v1083 = vsel %vm1082, %v1074, %v1079
        %v1084 = vrsqrt.pop %v978
        %v1085 = vmul.f32 %v1084, %v978
        %v1086 = vmul.f32 %v1085, %v1084
        %v1087 = vmul.f32 0.5, %v1086
        %v1088 = vsub.f32 1.5, %v1087
        %v1089 = vmul.f32 %v1084, %v1088
        %vm1090 = vweird.f32 %v978
        %vm1091 = vweird.f32 %v1084
        %vm1092 = vmor %vm1090, %vm1091
        %v1093 = vsel %vm1092, %v1084, %v1089
        %v1094 = vrsqrt.pop %v979
        %v1095 = vmul.f32 %v1094, %v979
        %v1096 = vmul.f32 %v1095, %v1094
        %v1097 = vmul.f32 0.5, %v1096
        %v1098 = vsub.f32 1.5, %v1097
        %v1099 = vmul.f32 %v1094, %v1098
        %vm1100 = vweird.f32 %v979
        %vm1101 = vweird.f32 %v1094
        %vm1102 = vmor %vm1100, %vm1101
        %v1103 = vsel %vm1102, %v1094, %v1099
        %v1104 = vrsqrt.pop %v980
        %v1105 = vmul.f32 %v1104, %v980
        %v1106 = vmul.f32 %v1105, %v1104
        %v1107 = vmul.f32 0.5, %v1106
        %v1108 = vsub.f32 1.5, %v1107
        %v1109 = vmul.f32 %v1104, %v1108
        %vm1110 = vweird.f32 %v980
        %vm1111 = vweird.f32 %v1104
        %vm1112 = vmor %vm1110, %vm1111
        %v1113 = vsel %vm1112, %v1104, %v1109
        %v1114 = vrsqrt.pop %v981
        %v1115 = vmul.f32 %v1114, %v981
        %v1116 = vmul.f32 %v1115, %v1114
        %v1117 = vmul.f32 0.5, %v1116
        %v1118 = vsub.f32 1.5, %v1117
        %v1119 = vmul.f32 %v1114, %v1118
        %vm1120 = vweird.f32 %v981
        %vm1121 = vweird.f32 %v1114
        %vm1122 = vmor %vm1120, %vm1121
        %v1123 = vsel %vm1122, %v1114, %v1119
        %v1124 = vrsqrt.pop %v982
        %v1125 = vmul.f32 %v1124, %v982
        %v1126 = vmul.f32 %v1125, %v1124
        %v1127 = vmul.f32 0.5, %v1126
        %v1128 = vsub.f32 1.5, %v1127
        %v1129 = vmul.f32 %v1124, %v1128
        %vm1130 = vweird.f32 %v982
        %vm1131 = vweird.f32 %v1124
        %vm1132 = vmor %vm1130, %vm1131
        %v1133 = vsel %vm1132, %v1124, %v1129
        %v1134 = vrsqrt.pop %v983
        %v1135 = vmul.f32 %v1134, %v983
        %v1136 = vmul.f32 %v1135, %v1134
        %v1137 = vmul.f32 0.5, %v1136
        %v1138 = vsub.f32 1.5, %v1137
        %v1139 = vmul.f32 %v1134, %v1138
        %vm1140 = vweird.f32 %v983
        %vm1141 = vweird.f32 %v1134
        %vm1142 = vmor %vm1140, %vm1141
        %v1143 = vsel %vm1142, %v1134, %v1139
        %v1144 = vmul.f32 %v888, %v993
        %v1145 = vmul.f32 %v889, %v1003
        %v1146 = vmul.f32 %v890, %v1013
        %v1147 = vmul.f32 %v891, %v1023
        %v1148 = vmul.f32 %v892, %v1033
        %v1149 = vmul.f32 %v893, %v1043
        %v1150 = vmul.f32 %v894, %v1053
        %v1151 = vmul.f32 %v895, %v1063
        %v1152 = vmul.f32 %v896, %v1073
        %v1153 = vmul.f32 %v897, %v1083
        %v1154 = vmul.f32 %v898, %v1093
        %v1155 = vmul.f32 %v899, %v1103
        %v1156 = vmul.f32 %v900, %v1113
        %v1157 = vmul.f32 %v901, %v1123
        %v1158 = vmul.f32 %v902, %v1133
        %v1159 = vmul.f32 %v903, %v1143
        %v1160 = vld [vmem:[%s374 + $0x1] sm:$0x1]
        %v1161 = vperm.slane %v1160, 0
        %v1162 = vmul.f32 %v1144, %v1161
        %v1163 = vmul.f32 %v1145, %v1161
        %v1164 = vmul.f32 %v1146, %v1161
        %v1165 = vmul.f32 %v1147, %v1161
        %v1166 = vmul.f32 %v1148, %v1161
        %v1167 = vmul.f32 %v1149, %v1161
        %v1168 = vmul.f32 %v1150, %v1161
        %v1169 = vmul.f32 %v1151, %v1161
        %v1170 = vmul.f32 %v1152, %v1161
        %v1171 = vmul.f32 %v1153, %v1161
        %v1172 = vmul.f32 %v1154, %v1161
        %v1173 = vmul.f32 %v1155, %v1161
        %v1174 = vmul.f32 %v1156, %v1161
        %v1175 = vmul.f32 %v1157, %v1161
        %v1176 = vmul.f32 %v1158, %v1161
        %v1177 = vmul.f32 %v1159, %v1161
        %v1178 = vld [vmem:[%s374 + $0x2] sm:$0x1]
        %v1179 = vperm.slane %v1178, 0
        %v1180 = vadd.f32 %v1162, %v1179
        %v1181 = vadd.f32 %v1163, %v1179
        %v1182 = vadd.f32 %v1164, %v1179
        %v1183 = vadd.f32 %v1165, %v1179
        %v1184 = vadd.f32 %v1166, %v1179
        %v1185 = vadd.f32 %v1167, %v1179
        %v1186 = vadd.f32 %v1168, %v1179
        %v1187 = vadd.f32 %v1169, %v1179
        %v1188 = vadd.f32 %v1170, %v1179
        %v1189 = vadd.f32 %v1171, %v1179
        %v1190 = vadd.f32 %v1172, %v1179
        %v1191 = vadd.f32 %v1173, %v1179
        %v1192 = vadd.f32 %v1174, %v1179
        %v1193 = vadd.f32 %v1175, %v1179
        %v1194 = vadd.f32 %v1176, %v1179
        %v1195 = vadd.f32 %v1177, %v1179
        %s1196 = smul.u32 %s35, 128
        %s1197 = scalar_lea.vmem [#allocation2], %s1196
        %v1198 = vld [vmem:[%s1197] sm:$0xff]
        %v1199 = vld [vmem:[%s1197 + $0x8] sm:$0xff]
        %v1200 = vld [vmem:[%s1197 + $0x10] sm:$0xff]
        %v1201 = vld [vmem:[%s1197 + $0x18] sm:$0xff]
        %v1202 = vld [vmem:[%s1197 + $0x20] sm:$0xff]
        %v1203 = vld [vmem:[%s1197 + $0x28] sm:$0xff]
        %v1204 = vld [vmem:[%s1197 + $0x30] sm:$0xff]
        %v1205 = vld [vmem:[%s1197 + $0x38] sm:$0xff]
        %v1206 = vld [vmem:[%s1197 + $0x40] sm:$0xff]
        %v1207 = vld [vmem:[%s1197 + $0x48] sm:$0xff]
        %v1208 = vld [vmem:[%s1197 + $0x50] sm:$0xff]
        %v1209 = vld [vmem:[%s1197 + $0x58] sm:$0xff]
        %v1210 = vld [vmem:[%s1197 + $0x60] sm:$0xff]
        %v1211 = vld [vmem:[%s1197 + $0x68] sm:$0xff]
        %v1212 = vld [vmem:[%s1197 + $0x70] sm:$0xff]
        %v1213 = vld [vmem:[%s1197 + $0x78] sm:$0xff]
        %v1214 = vmax.f32 %v1180, 0.0
        %v1215 = vmax.f32 %v1181, 0.0
        %v1216 = vmax.f32 %v1182, 0.0
        %v1217 = vmax.f32 %v1183, 0.0
        %v1218 = vmax.f32 %v1184, 0.0
        %v1219 = vmax.f32 %v1185, 0.0
        %v1220 = vmax.f32 %v1186, 0.0
        %v1221 = vmax.f32 %v1187, 0.0
        %v1222 = vmax.f32 %v1188, 0.0
        %v1223 = vmax.f32 %v1189, 0.0
        %v1224 = vmax.f32 %v1190, 0.0
        %v1225 = vmax.f32 %v1191, 0.0
        %v1226 = vmax.f32 %v1192, 0.0
        %v1227 = vmax.f32 %v1193, 0.0
        %v1228 = vmax.f32 %v1194, 0.0
        %v1229 = vmax.f32 %v1195, 0.0
        %v1230 = vadd.f32 %v1198, %v1214
        %v1231 = vadd.f32 %v1199, %v1215
        %v1232 = vadd.f32 %v1200, %v1216
        %v1233 = vadd.f32 %v1201, %v1217
        %v1234 = vadd.f32 %v1202, %v1218
        %v1235 = vadd.f32 %v1203, %v1219
        %v1236 = vadd.f32 %v1204, %v1220
        %v1237 = vadd.f32 %v1205, %v1221
        %v1238 = vadd.f32 %v1206, %v1222
        %v1239 = vadd.f32 %v1207, %v1223
        %v1240 = vadd.f32 %v1208, %v1224
        %v1241 = vadd.f32 %v1209, %v1225
        %v1242 = vadd.f32 %v1210, %v1226
        %v1243 = vadd.f32 %v1211, %v1227
        %v1244 = vadd.f32 %v1212, %v1228
        %v1245 = vadd.f32 %v1213, %v1229
        %1246 = vst [vmem:[%s1197] sm:$0xff] %v1230
        %1247 = vst [vmem:[%s1197 + $0x8] sm:$0xff] %v1231
        %1248 = vst [vmem:[%s1197 + $0x10] sm:$0xff] %v1232
        %1249 = vst [vmem:[%s1197 + $0x18] sm:$0xff] %v1233
        %1250 = vst [vmem:[%s1197 + $0x20] sm:$0xff] %v1234
        %1251 = vst [vmem:[%s1197 + $0x28] sm:$0xff] %v1235
        %1252 = vst [vmem:[%s1197 + $0x30] sm:$0xff] %v1236
        %1253 = vst [vmem:[%s1197 + $0x38] sm:$0xff] %v1237
        %1254 = vst [vmem:[%s1197 + $0x40] sm:$0xff] %v1238
        %1255 = vst [vmem:[%s1197 + $0x48] sm:$0xff] %v1239
        %1256 = vst [vmem:[%s1197 + $0x50] sm:$0xff] %v1240
        %1257 = vst [vmem:[%s1197 + $0x58] sm:$0xff] %v1241
        %1258 = vst [vmem:[%s1197 + $0x60] sm:$0xff] %v1242
        %1259 = vst [vmem:[%s1197 + $0x68] sm:$0xff] %v1243
        %1260 = vst [vmem:[%s1197 + $0x70] sm:$0xff] %v1244
        %1261 = vst [vmem:[%s1197 + $0x78] sm:$0xff] %v1245
        %p1262 = scmp.eq.s32.totalorder %s34, 1
        %p1263 = pnand %p1262, %p434
        %p1264 = pneg %p1263
        // Predicated region
        $region69: #{tpu_custom_call.1} parent=39 // pred_check
          _
        $region70: #{tpu_custom_call.1} parent=39 // pred_check_branch
          %1266 = sbr.rel (%p1263) target = $region72
        $region71: #{tpu_custom_call.1} parent=39 // pred_region
          %v1267 = vld [vmem:[%s384] sm:$0xff]
          %v1268 = vld [vmem:[#allocation2] sm:$0xff]
          %v1269 = vld [vmem:[#allocation2 + $0x8] sm:$0xff]
          %v1270 = vld [vmem:[#allocation2 + $0x10] sm:$0xff]
          %v1271 = vld [vmem:[#allocation2 + $0x18] sm:$0xff]
          %v1272 = vld [vmem:[#allocation2 + $0x20] sm:$0xff]
          %v1273 = vld [vmem:[#allocation2 + $0x28] sm:$0xff]
          %v1274 = vld [vmem:[#allocation2 + $0x30] sm:$0xff]
          %v1275 = vld [vmem:[#allocation2 + $0x38] sm:$0xff]
          %v1276 = vld [vmem:[#allocation2 + $0x40] sm:$0xff]
          %v1277 = vld [vmem:[#allocation2 + $0x48] sm:$0xff]
          %v1278 = vld [vmem:[#allocation2 + $0x50] sm:$0xff]
          %v1279 = vld [vmem:[#allocation2 + $0x58] sm:$0xff]
          %v1280 = vld [vmem:[#allocation2 + $0x60] sm:$0xff]
          %v1281 = vld [vmem:[#allocation2 + $0x68] sm:$0xff]
          %v1282 = vld [vmem:[#allocation2 + $0x70] sm:$0xff]
          %v1283 = vld [vmem:[#allocation2 + $0x78] sm:$0xff]
          %1284 = vmatpush.msra.mxu0 %v1283
          %1285 = vmatpush.msra.mxu0 %v1282
          %1286 = vmatpush.msra.mxu0 %v1281
          %1287 = vmatpush.msra.mxu0 %v1280
          %1288 = vmatpush.msra.mxu0 %v1279
          %1289 = vmatpush.msra.mxu0 %v1278
          %1290 = vmatpush.msra.mxu0 %v1277
          %1291 = vmatpush.msra.mxu0 %v1276
          %1292 = vmatpush.msra.mxu0 %v1275
          %1293 = vmatpush.msra.mxu0 %v1274
          %1294 = vmatpush.msra.mxu0 %v1273
          %1295 = vmatpush.msra.mxu0 %v1272
          %1296 = vmatpush.msra.mxu0 %v1271
          %1297 = vmatpush.msra.mxu0 %v1270
          %1298 = vmatpush.msra.mxu0 %v1269
          %1299 = vmatpush.msra.mxu0 %v1268
          %1300 = vmatmul.f32.gmra.mxu0 %v1267
          %v1301 = vpop.f32.mrf.mxu0
          %v1302 = vadd.f32 0.0, %v1301
          %1303 = vdwg.mxu0
          %1304 = vst [vmem:[%s431] sm:$0xff] %v1302
        $region72: #{tpu_custom_call.1} parent=39 // pred_fallthru
          _
        %s1305 = sand.u32 %s191, 1
        %s1306 = scalar_lea.sflag [#allocation6], %s1305
        %s1307 = sand.u32 %s191, 1
        %s1308 = smul.addr %s1307, 8
        %s1309 = scalar_lea.vmem [#allocation13], %s1308
        // Predicated region
        $region73: #{tpu_custom_call.1} parent=39 // pred_check
          %p1310 = pneg %p201
        $region74: #{tpu_custom_call.1} parent=39 // pred_check_branch
          %1312 = sbr.rel (%p1310) target = $region76
        $region75: #{tpu_custom_call.1} parent=39 // pred_region
          %1314 = vsyncadd %s1306, 0
          %s1315 = smul.addr %s33, 8
          %s1316 = scalar_lea.hbm %s5, %s1315
          %s1318 = sshll.u32 %s1309, 4
          %s1319 = int_to_ptr.vmem [resolvable:$true] %s1318
          %s1320 = sshll.u32 %s1316, 4
          %s1321 = int_to_ptr.hbm [resolvable:$true] %s1320
          %1323 = dma.vmem_to_hbm [thread:$0]  %s1319, 128, %s1321, %s1306
        $region76: #{tpu_custom_call.1} parent=39 // pred_fallthru
          _
      $region40: #{tpu_custom_call.1} parent=5 // pred_fallthru
        _
      %p1324 = scmp.le.s32.totalorder 2, %s23
      // Predicated region
      $region77: #{tpu_custom_call.1} parent=5 // pred_check
        %p1325 = pneg %p1324
      $region78: #{tpu_custom_call.1} parent=5 // pred_check_branch
        %1327 = sbr.rel (%p1325) target = $region80
      $region79: #{tpu_custom_call.1} parent=5 // pred_region
        %s1328 = ssub.s32 %s23, 2
        // Predicated region
        $region81: #{tpu_custom_call.1} parent=79 // pred_check
          %p1329 = pneg %p207
        $region82: #{tpu_custom_call.1} parent=79 // pred_check_branch
          %1331 = sbr.rel (%p1329) target = $region84
        $region83: #{tpu_custom_call.1} parent=79 // pred_region
          %s1332 = sand.u32 %s192, 1
          %s1333 = scalar_lea.sflag [#allocation6], %s1332
          %s1334 = sand.u32 %s192, 1
          %s1335 = smul.addr %s1334, 8
          %s1336 = scalar_lea.vmem [#allocation13], %s1335
          %1338 = dma.done %s1333, 128
        $region84: #{tpu_custom_call.1} parent=79 // pred_fallthru
          _
      $region80: #{tpu_custom_call.1} parent=5 // pred_fallthru
        _
    $region6: #{tpu_custom_call.1} parent=1 // loop_footer
      %s27 = sadd.s32 1, %s23
    $region7: #{tpu_custom_call.1} parent=1 // loop_footer_branch
      %22 = sbr.rel target = $region3
    $region8: #{tpu_custom_call.1} parent=1 // loop_exit
      _
    %1339 = vsyncpa [#allocation5], 1
    %s1340 = scalar_lea.sflag [#allocation5], 1
    %1341 = vsyncpa %s1340, 1
    %1342 = vsyncpa [#allocation8], 1
    %s1343 = scalar_lea.sflag [#allocation8], 1
    %1344 = vsyncpa %s1343, 1
    %1345 = vsyncpa [#allocation11], 1
    %s1346 = scalar_lea.sflag [#allocation11], 1
    %1347 = vsyncpa %s1346, 1
    %1348 = vsyncpa [#allocation6], 1
    %s1349 = scalar_lea.sflag [#allocation6], 1
    %1350 = vsyncpa %s1349, 1

</llo_original>
